<compile_context>
chip_gen: v6e
topology: v6e:2x2x1
jax: 0.10.0
libtpu: 0.0.40
codegen_flags: <defaults>
</compile_context>

<pallas_src>
import functools
import math

import jax
import jax.numpy as jnp
from jax.experimental import pallas as pl
from jax.experimental.pallas import tpu as pltpu


def _encoder_kernel(
    x_ref, mask_ref,
    wqkv_ref, bqkv_ref, wo_ref, bo_ref,
    gamma_ref, beta_ref,
    w1_ref, b1_ref, w2_ref, b2_ref,
    o_ref,
    carry_ref,
    *, n_heads: int, eps: float,
):
    """Fused encoder stack. grid = (batch, n_layers); layer axis is 'arbitrary'.

    The per-batch activation lives in `carry_ref` (VMEM, f32) across all layer
    steps; x / output cross HBM exactly once per batch element and the shared
    weights are fetched once for the whole grid.
    """
    layer = pl.program_id(1)
    n_layers = pl.num_programs(1)

    # Load the input activation into the VMEM carry at the first layer only.
    @pl.when(layer == 0)
    def _():
        carry_ref[...] = x_ref[0].astype(jnp.float32)

    x = carry_ref[...]                                  # (S, D) f32 residual
    S, D = x.shape
    H = n_heads
    Dh = D // H
    scale = 1.0 / math.sqrt(Dh)

    cdt = wqkv_ref.dtype                                # matmul compute dtype (bf16)

    # Additive key-padding bias (0 keep, -1e9 masked), tiny (1, 1, S) compute.
    bias = (1.0 - mask_ref[...].astype(jnp.float32)) * (-1e9)   # (1, 1, S)

    gamma = gamma_ref[...].astype(jnp.float32)          # (1, D)
    beta = beta_ref[...].astype(jnp.float32)            # (1, D)

    def layer_norm(a):                                  # f32 in / f32 out
        mu = jnp.mean(a, axis=-1, keepdims=True)
        var = jnp.mean(jnp.square(a - mu), axis=-1, keepdims=True)
        return (a - mu) * jax.lax.rsqrt(var + eps) * gamma + beta

    def dense(a, w_ref, b_ref):                         # bf16 MXU, f32 accumulate
        return (
            jnp.dot(a.astype(cdt), w_ref[...], preferred_element_type=jnp.float32)
            + b_ref[...].astype(jnp.float32)
        )

    # ---- Multi-head self attention -------------------------------------------
    # Fused QKV projection: one (S, D) x (D, 3D) matmul.
    qkv = dense(x, wqkv_ref, bqkv_ref)                  # (S, 3D) f32
    q = qkv[:, 0:D] * scale                             # fold softmax scale into q
    k = qkv[:, D:2 * D]
    v = qkv[:, 2 * D:3 * D]

    def split_heads(t):                                 # (S, D) -> (H, S, Dh)
        return jnp.stack(
            [t[:, h * Dh:(h + 1) * Dh] for h in range(H)], axis=0
        ).astype(cdt)

    q3 = split_heads(q)
    k3 = split_heads(k)
    v3 = split_heads(v)

    # Heads batched in a single dot_general.
    s = jnp.einsum("hqd,hkd->hqk", q3, k3,
                   preferred_element_type=jnp.float32)  # (H, S, S) f32
    s = s + bias                                        # mask added once, all heads
    s = s - jnp.max(s, axis=-1, keepdims=True)
    p = jnp.exp(s)
    p = p * pl.reciprocal(jnp.sum(p, axis=-1, keepdims=True), approx=True)

    ctx = jnp.einsum("hqk,hkd->hqd", p.astype(cdt), v3,
                     preferred_element_type=jnp.float32)           # (H, S, Dh)
    concat = jnp.concatenate([ctx[h] for h in range(H)], axis=-1)  # (S, D)
    attn = dense(concat, wo_ref, bo_ref)

    # ---- Add & Norm #1 --------------------------------------------------------
    a = layer_norm(x + attn)

    # ---- FeedForward: Linear -> ReLU -> Linear --------------------------------
    h1 = jnp.maximum(dense(a, w1_ref, b1_ref), 0.0)
    h2 = dense(h1, w2_ref, b2_ref)

    # ---- Add & Norm #2 --------------------------------------------------------
    y = layer_norm(a + h2)

    carry_ref[...] = y                                  # carry to next layer

    @pl.when(layer == n_layers - 1)
    def _():
        o_ref[0] = y.astype(o_ref.dtype)


def make_encoder_call(batch, seq, d_model, d_ff, n_layers, n_heads,
                      out_dtype, eps=1e-5):
    """Build the single fused pallas_call for the whole encoder stack."""
    def rep(shape):                                     # replicated (weights)
        return pl.BlockSpec(shape, lambda b, l, _n=len(shape): (0,) * _n)

    x_spec = pl.BlockSpec((1, seq, d_model), lambda b, l: (b, 0, 0))
    m_spec = pl.BlockSpec((1, 1, seq), lambda b, l: (b, 0, 0))

    in_specs = [
        x_spec, m_spec,
        rep((d_model, 3 * d_model)), rep((1, 3 * d_model)),   # fused Wqkv, bqkv
        rep((d_model, d_model)), rep((1, d_model)),           # Wo, bo
        rep((1, d_model)), rep((1, d_model)),                 # LayerNorm gamma, beta
        rep((d_model, d_ff)), rep((1, d_ff)),                 # W1, b1
        rep((d_ff, d_model)), rep((1, d_model)),              # W2, b2
    ]

    return pl.pallas_call(
        functools.partial(_encoder_kernel, n_heads=n_heads, eps=eps),
        out_shape=jax.ShapeDtypeStruct((batch, seq, d_model), out_dtype),
        grid_spec=pltpu.PrefetchScalarGridSpec(
            num_scalar_prefetch=0,
            grid=(batch, n_layers),                     # layer axis innermost
            in_specs=in_specs,
            out_specs=x_spec,                           # same block across layers
            scratch_shapes=[pltpu.VMEM((seq, d_model), jnp.float32)],
        ),
        compiler_params=pltpu.CompilerParams(
            dimension_semantics=("parallel", "arbitrary"),
            vmem_limit_bytes=32 * 1024 * 1024,          # safe on v5e/v6e/v7x
        ),
    )


def encoder_forward(x, mask, params, n_layers, n_heads,
                    compute_dtype=jnp.bfloat16):
    """Stack of n_layers EncoderLayers (shared weights, per the PyTorch copy())."""
    batch, seq, d_model = x.shape
    d_ff = params["w1"].shape[-1]
    assert d_model % n_heads == 0

    if mask is None:
        key_mask = jnp.ones((batch, 1, seq), jnp.float32)
    else:
        key_mask = mask.astype(jnp.float32).reshape(batch, 1, seq)

    cd = compute_dtype
    # Fuse Q/K/V projection weights once in the wrapper (one-time XLA concat).
    wqkv = jnp.concatenate([params["wq"], params["wk"], params["wv"]], axis=1)
    bqkv = jnp.concatenate([params["bq"], params["bk"], params["bv"]], axis=1)

    call = make_encoder_call(batch, seq, d_model, d_ff, n_layers, n_heads, x.dtype)
    return call(
        x, key_mask,
        wqkv.astype(cd), bqkv,
        params["wo"].astype(cd), params["bo"],
        params["gamma"], params["beta"],
        params["w1"].astype(cd), params["b1"],
        params["w2"].astype(cd), params["b2"],
    )


def reference_forward(x, mask, params, n_layers, n_heads,
                      compute_dtype=jnp.float32):
    """Pure-JAX reference. compute_dtype controls the matmul operand precision."""
    batch, seq, d_model = x.shape
    n_h = n_heads
    d_h = d_model // n_h
    f32 = jnp.float32
    cd = compute_dtype

    if mask is None:
        bias = jnp.zeros((batch, 1, 1, seq), f32)
    else:
        bias = (1.0 - mask.astype(f32)).reshape(batch, 1, 1, seq) * (-1e9)

    def dense(a, w, b):
        return jnp.einsum("...i,ij->...j", a.astype(cd), w.astype(cd),
                          preferred_element_type=f32) + b[0]

    gamma, beta = params["gamma"][0], params["beta"][0]

    def ln(a):
        mu = jnp.mean(a, -1, keepdims=True)
        var = jnp.mean(jnp.square(a - mu), -1, keepdims=True)
        return (a - mu) / jnp.sqrt(var + 1e-5) * gamma + beta

    def split(t):
        return t.reshape(batch, seq, n_h, d_h).transpose(0, 2, 1, 3).astype(cd)

    x = x.astype(f32)
    for _ in range(n_layers):
        q = split(dense(x, params["wq"], params["bq"]))
        k = split(dense(x, params["wk"], params["bk"]))
        v = split(dense(x, params["wv"], params["bv"]))
        s = jnp.einsum("bhqd,bhkd->bhqk", q, k, preferred_element_type=f32)
        s = s / math.sqrt(d_h) + bias
        p = jax.nn.softmax(s, axis=-1)
        ctx = jnp.einsum("bhqk,bhkd->bhqd", p.astype(cd), v,
                         preferred_element_type=f32)
        ctx = ctx.transpose(0, 2, 1, 3).reshape(batch, seq, d_model)
        attn = dense(ctx, params["wo"], params["bo"])
        a = ln(x + attn)
        h = dense(jnp.maximum(dense(a, params["w1"], params["b1"]), 0.0),
                  params["w2"], params["b2"])
        x = ln(a + h)
    return x


if __name__ == "__main__":
    # Small shapes consistent with the module's (batch, seq_len, d_model) contract.
    BATCH, SEQ, D_MODEL, D_FF, N_HEADS, N_LAYERS = 2, 8, 32, 64, 4, 2

    key = jax.random.PRNGKey(0)
    ks = jax.random.split(key, 13)
    init = lambda k, shape: jax.random.normal(k, shape, jnp.float32) * 0.05

    params = {
        "wq": init(ks[0], (D_MODEL, D_MODEL)), "bq": init(ks[1], (1, D_MODEL)),
        "wk": init(ks[2], (D_MODEL, D_MODEL)), "bk": init(ks[3], (1, D_MODEL)),
        "wv": init(ks[4], (D_MODEL, D_MODEL)), "bv": init(ks[5], (1, D_MODEL)),
        "wo": init(ks[6], (D_MODEL, D_MODEL)), "bo": init(ks[7], (1, D_MODEL)),
        "gamma": jnp.ones((1, D_MODEL), jnp.float32),
        "beta": jnp.zeros((1, D_MODEL), jnp.float32),
        "w1": init(ks[8], (D_MODEL, D_FF)), "b1": init(ks[9], (1, D_FF)),
        "w2": init(ks[10], (D_FF, D_MODEL)), "b2": init(ks[11], (1, D_MODEL)),
    }

    x = jax.random.normal(ks[12], (BATCH, SEQ, D_MODEL), jnp.float32)
    # padding mask: 1 = keep token, 0 = padded (last two positions of batch 1 padded)
    mask = jnp.ones((BATCH, SEQ), jnp.int32).at[1, -2:].set(0)

    out = encoder_forward(x, mask, params, N_LAYERS, N_HEADS)
    out = jax.block_until_ready(out)
    assert out.shape == (BATCH, SEQ, D_MODEL)

    # Matched mixed-precision reference (bf16 matmul operands, f32 accumulation);
    # remaining gap is the approx-reciprocal softmax denominator / scale folding.
    ref_bf16 = reference_forward(x, mask, params, N_LAYERS, N_HEADS, jnp.bfloat16)
    assert jnp.allclose(out, ref_bf16, rtol=2e-2, atol=2e-2), "mismatch vs bf16 reference"

    # Full f32 reference: tolerance widened for bf16 MXU + approx reciprocal.
    ref_f32 = reference_forward(x, mask, params, N_LAYERS, N_HEADS, jnp.float32)
    assert jnp.allclose(out, ref_f32, rtol=5e-2, atol=5e-2), "mismatch vs f32 reference"

    print("KERNEL_OK")
</pallas_src>

<mosaic_0001>
module attributes {stable_mosaic.version = 11 : i64} {
  func.func @_encoder_kernel(%arg0: i32, %arg1: i32, %arg2: memref<1x8x32xf32, #tpu.memory_space<vmem>>, %arg3: memref<1x1x8xf32, #tpu.memory_space<vmem>>, %arg4: memref<32x96xbf16, #tpu.memory_space<vmem>>, %arg5: memref<1x96xf32, #tpu.memory_space<vmem>>, %arg6: memref<32x32xbf16, #tpu.memory_space<vmem>>, %arg7: memref<1x32xf32, #tpu.memory_space<vmem>>, %arg8: memref<1x32xf32, #tpu.memory_space<vmem>>, %arg9: memref<1x32xf32, #tpu.memory_space<vmem>>, %arg10: memref<32x64xbf16, #tpu.memory_space<vmem>>, %arg11: memref<1x64xf32, #tpu.memory_space<vmem>>, %arg12: memref<64x32xbf16, #tpu.memory_space<vmem>>, %arg13: memref<1x32xf32, #tpu.memory_space<vmem>>, %arg14: memref<1x8x32xf32, #tpu.memory_space<vmem>>, %arg15: memref<8x32xf32, #tpu.memory_space<vmem>>) attributes {dimension_semantics = [#tpu.dimension_semantics<parallel>, #tpu.dimension_semantics<arbitrary>], iteration_bounds = array<i64: 2, 2>, scalar_prefetch = 0 : i64, scratch_operands = 1 : i64, tpu.core_type = #tpu.core_type<tc>, window_params = [{transform_indices = @transform_0, window_bounds = array<i64: 1, 8, 32>}, {transform_indices = @transform_1, window_bounds = array<i64: 1, 1, 8>}, {pipeline_mode = #tpu.pipeline_mode<synchronous>, transform_indices = @transform_2, window_bounds = array<i64: 32, 96>}, {pipeline_mode = #tpu.pipeline_mode<synchronous>, transform_indices = @transform_3, window_bounds = array<i64: 1, 96>}, {pipeline_mode = #tpu.pipeline_mode<synchronous>, transform_indices = @transform_4, window_bounds = array<i64: 32, 32>}, {pipeline_mode = #tpu.pipeline_mode<synchronous>, transform_indices = @transform_5, window_bounds = array<i64: 1, 32>}, {pipeline_mode = #tpu.pipeline_mode<synchronous>, transform_indices = @transform_6, window_bounds = array<i64: 1, 32>}, {pipeline_mode = #tpu.pipeline_mode<synchronous>, transform_indices = @transform_7, window_bounds = array<i64: 1, 32>}, {pipeline_mode = #tpu.pipeline_mode<synchronous>, transform_indices = @transform_8, window_bounds = array<i64: 32, 64>}, {pipeline_mode = #tpu.pipeline_mode<synchronous>, transform_indices = @transform_9, window_bounds = array<i64: 1, 64>}, {pipeline_mode = #tpu.pipeline_mode<synchronous>, transform_indices = @transform_10, window_bounds = array<i64: 64, 32>}, {pipeline_mode = #tpu.pipeline_mode<synchronous>, transform_indices = @transform_11, window_bounds = array<i64: 1, 32>}, {transform_indices = @transform_12, window_bounds = array<i64: 1, 8, 32>}]} {
    %c0_i32 = arith.constant 0 : i32
    %0 = arith.cmpi eq, %arg1, %c0_i32 : i32
    %1 = arith.extui %0 : i1 to i32
    %c0_i32_0 = arith.constant 0 : i32
    %2 = arith.cmpi ne, %1, %c0_i32_0 : i32
    scf.if %2 {
      %c0_49 = arith.constant 0 : index
      %c0_50 = arith.constant 0 : index
      %c0_51 = arith.constant 0 : index
      %146 = vector.load %arg2[%c0_49, %c0_50, %c0_51] : memref<1x8x32xf32, #tpu.memory_space<vmem>>, vector<1x8x32xf32>
      %147 = vector.shape_cast %146 : vector<1x8x32xf32> to vector<8x32xf32>
      %c0_52 = arith.constant 0 : index
      %c0_53 = arith.constant 0 : index
      %148 = vector.load %arg15[%c0_52, %c0_53] : memref<8x32xf32, #tpu.memory_space<vmem>>, vector<8x32xf32>
      tpu.vector_store %arg15[%c0_52, %c0_53], %147 {strides = array<i32>} : memref<8x32xf32, #tpu.memory_space<vmem>>, vector<8x32xf32>,
    } else {
    }
    %c0 = arith.constant 0 : index
    %c0_1 = arith.constant 0 : index
    %3 = vector.load %arg15[%c0, %c0_1] : memref<8x32xf32, #tpu.memory_space<vmem>>, vector<8x32xf32>
    %c0_2 = arith.constant 0 : index
    %c0_3 = arith.constant 0 : index
    %c0_4 = arith.constant 0 : index
    %4 = vector.load %arg3[%c0_2, %c0_3, %c0_4] : memref<1x1x8xf32, #tpu.memory_space<vmem>>, vector<1x1x8xf32>
    %cst = arith.constant 1.000000e+00 : f32
    %5 = vector.broadcast %cst : f32 to vector<1x1x8xf32>
    %6 = arith.subf %5, %4 : vector<1x1x8xf32>
    %cst_5 = arith.constant -1.000000e+09 : f32
    %7 = vector.broadcast %cst_5 : f32 to vector<1x1x8xf32>
    %8 = arith.mulf %6, %7 : vector<1x1x8xf32>
    %c0_6 = arith.constant 0 : index
    %c0_7 = arith.constant 0 : index
    %9 = vector.load %arg8[%c0_6, %c0_7] : memref<1x32xf32, #tpu.memory_space<vmem>>, vector<1x32xf32>
    %c0_8 = arith.constant 0 : index
    %c0_9 = arith.constant 0 : index
    %10 = vector.load %arg9[%c0_8, %c0_9] : memref<1x32xf32, #tpu.memory_space<vmem>>, vector<1x32xf32>
    %11 = arith.truncf %3 : vector<8x32xf32> to vector<8x32xbf16>
    %c0_10 = arith.constant 0 : index
    %c0_11 = arith.constant 0 : index
    %12 = vector.load %arg4[%c0_10, %c0_11] : memref<32x96xbf16, #tpu.memory_space<vmem>>, vector<32x96xbf16>
    %cst_12 = arith.constant dense<0.000000e+00> : vector<8x96xf32>
    %13 = tpu.matmul %11, %12, %cst_12 {dimension_numbers = #tpu.dot_dimension_numbers<[1], [0], [0], [1], [0, 0, 1, 1], [], []>} : vector<8x32xbf16>, vector<32x96xbf16>, vector<8x96xf32> -> vector<8x96xf32>
    %c0_13 = arith.constant 0 : index
    %c0_14 = arith.constant 0 : index
    %14 = vector.load %arg5[%c0_13, %c0_14] : memref<1x96xf32, #tpu.memory_space<vmem>>, vector<1x96xf32>
    %15 = vector.broadcast %14 : vector<1x96xf32> to vector<8x96xf32>
    %16 = arith.addf %13, %15 : vector<8x96xf32>
    %17 = vector.extract_strided_slice %16 {offsets = [0, 0], sizes = [8, 32], strides = [1, 1]} : vector<8x96xf32> to vector<8x32xf32>
    %cst_15 = arith.constant 0.353553385 : f32
    %18 = vector.broadcast %cst_15 : f32 to vector<8x32xf32>
    %19 = arith.mulf %17, %18 : vector<8x32xf32>
    %20 = vector.extract_strided_slice %16 {offsets = [0, 32], sizes = [8, 32], strides = [1, 1]} : vector<8x96xf32> to vector<8x32xf32>
    %21 = vector.extract_strided_slice %16 {offsets = [0, 64], sizes = [8, 32], strides = [1, 1]} : vector<8x96xf32> to vector<8x32xf32>
    %22 = vector.extract_strided_slice %19 {offsets = [0, 0], sizes = [8, 8], strides = [1, 1]} : vector<8x32xf32> to vector<8x8xf32>
    %23 = vector.extract_strided_slice %19 {offsets = [0, 8], sizes = [8, 8], strides = [1, 1]} : vector<8x32xf32> to vector<8x8xf32>
    %24 = vector.extract_strided_slice %19 {offsets = [0, 16], sizes = [8, 8], strides = [1, 1]} : vector<8x32xf32> to vector<8x8xf32>
    %25 = vector.extract_strided_slice %19 {offsets = [0, 24], sizes = [8, 8], strides = [1, 1]} : vector<8x32xf32> to vector<8x8xf32>
    %26 = vector.shape_cast %22 : vector<8x8xf32> to vector<1x8x8xf32>
    %27 = vector.shape_cast %23 : vector<8x8xf32> to vector<1x8x8xf32>
    %28 = vector.shape_cast %24 : vector<8x8xf32> to vector<1x8x8xf32>
    %29 = vector.shape_cast %25 : vector<8x8xf32> to vector<1x8x8xf32>
    %30 = tpu.concatenate %26, %27, %28, %29 in 0 : vector<1x8x8xf32>, vector<1x8x8xf32>, vector<1x8x8xf32>, vector<1x8x8xf32> -> vector<4x8x8xf32>
    %31 = arith.truncf %30 : vector<4x8x8xf32> to vector<4x8x8xbf16>
    %32 = vector.extract_strided_slice %20 {offsets = [0, 0], sizes = [8, 8], strides = [1, 1]} : vector<8x32xf32> to vector<8x8xf32>
    %33 = vector.extract_strided_slice %20 {offsets = [0, 8], sizes = [8, 8], strides = [1, 1]} : vector<8x32xf32> to vector<8x8xf32>
    %34 = vector.extract_strided_slice %20 {offsets = [0, 16], sizes = [8, 8], strides = [1, 1]} : vector<8x32xf32> to vector<8x8xf32>
    %35 = vector.extract_strided_slice %20 {offsets = [0, 24], sizes = [8, 8], strides = [1, 1]} : vector<8x32xf32> to vector<8x8xf32>
    %36 = vector.shape_cast %32 : vector<8x8xf32> to vector<1x8x8xf32>
    %37 = vector.shape_cast %33 : vector<8x8xf32> to vector<1x8x8xf32>
    %38 = vector.shape_cast %34 : vector<8x8xf32> to vector<1x8x8xf32>
    %39 = vector.shape_cast %35 : vector<8x8xf32> to vector<1x8x8xf32>
    %40 = tpu.concatenate %36, %37, %38, %39 in 0 : vector<1x8x8xf32>, vector<1x8x8xf32>, vector<1x8x8xf32>, vector<1x8x8xf32> -> vector<4x8x8xf32>
    %41 = arith.truncf %40 : vector<4x8x8xf32> to vector<4x8x8xbf16>
    %42 = vector.extract_strided_slice %21 {offsets = [0, 0], sizes = [8, 8], strides = [1, 1]} : vector<8x32xf32> to vector<8x8xf32>
    %43 = vector.extract_strided_slice %21 {offsets = [0, 8], sizes = [8, 8], strides = [1, 1]} : vector<8x32xf32> to vector<8x8xf32>
    %44 = vector.extract_strided_slice %21 {offsets = [0, 16], sizes = [8, 8], strides = [1, 1]} : vector<8x32xf32> to vector<8x8xf32>
    %45 = vector.extract_strided_slice %21 {offsets = [0, 24], sizes = [8, 8], strides = [1, 1]} : vector<8x32xf32> to vector<8x8xf32>
    %46 = vector.shape_cast %42 : vector<8x8xf32> to vector<1x8x8xf32>
    %47 = vector.shape_cast %43 : vector<8x8xf32> to vector<1x8x8xf32>
    %48 = vector.shape_cast %44 : vector<8x8xf32> to vector<1x8x8xf32>
    %49 = vector.shape_cast %45 : vector<8x8xf32> to vector<1x8x8xf32>
    %50 = tpu.concatenate %46, %47, %48, %49 in 0 : vector<1x8x8xf32>, vector<1x8x8xf32>, vector<1x8x8xf32>, vector<1x8x8xf32> -> vector<4x8x8xf32>
    %51 = arith.truncf %50 : vector<4x8x8xf32> to vector<4x8x8xbf16>
    "tpu.trace_start"() <{level = 10 : i32, message = "hqd,hkd->hqk"}> : () -> ()
    %cst_16 = arith.constant dense<0.000000e+00> : vector<4x8x8xf32>
    %52 = tpu.matmul %31, %41, %cst_16 {dimension_numbers = #tpu.dot_dimension_numbers<[2], [2], [1], [1], [0, 0, 0, 1, 1, 1], [0], [0]>} : vector<4x8x8xbf16>, vector<4x8x8xbf16>, vector<4x8x8xf32> -> vector<4x8x8xf32>
    "tpu.trace_stop"() : () -> ()
    %53 = vector.broadcast %8 : vector<1x1x8xf32> to vector<4x8x8xf32>
    %54 = arith.addf %52, %53 : vector<4x8x8xf32>
    %cst_17 = arith.constant dense<0xFF800000> : vector<4x8xf32>
    %55 = vector.multi_reduction <maximumf>, %54, %cst_17 [2] : vector<4x8x8xf32> to vector<4x8xf32>
    %56 = vector.shape_cast %55 : vector<4x8xf32> to vector<4x8x1xf32>
    %57 = vector.broadcast %56 : vector<4x8x1xf32> to vector<4x8x8xf32>
    %58 = arith.subf %54, %57 : vector<4x8x8xf32>
    %59 = math.exp %58 : vector<4x8x8xf32>
    %cst_18 = arith.constant dense<0.000000e+00> : vector<4x8xf32>
    %60 = vector.multi_reduction <add>, %59, %cst_18 [2] : vector<4x8x8xf32> to vector<4x8xf32>
    %61 = vector.shape_cast %60 : vector<4x8xf32> to vector<4x8x1xf32>
    %62 = tpu.reciprocal %61 {approx = true} : vector<4x8x1xf32> -> vector<4x8x1xf32>
    %63 = vector.broadcast %62 : vector<4x8x1xf32> to vector<4x8x8xf32>
    %64 = arith.mulf %59, %63 : vector<4x8x8xf32>
    %65 = arith.truncf %64 : vector<4x8x8xf32> to vector<4x8x8xbf16>
    "tpu.trace_start"() <{level = 10 : i32, message = "hqk,hkd->hqd"}> : () -> ()
    %cst_19 = arith.constant dense<0.000000e+00> : vector<4x8x8xf32>
    %66 = tpu.matmul %65, %51, %cst_19 {dimension_numbers = #tpu.dot_dimension_numbers<[2], [1], [1], [2], [0, 0, 0, 1, 1, 2], [0], [0]>} : vector<4x8x8xbf16>, vector<4x8x8xbf16>, vector<4x8x8xf32> -> vector<4x8x8xf32>
    "tpu.trace_stop"() : () -> ()
    %67 = vector.extract_strided_slice %66 {offsets = [0, 0, 0], sizes = [1, 8, 8], strides = [1, 1, 1]} : vector<4x8x8xf32> to vector<1x8x8xf32>
    %68 = vector.shape_cast %67 : vector<1x8x8xf32> to vector<8x8xf32>
    %69 = vector.extract_strided_slice %66 {offsets = [1, 0, 0], sizes = [1, 8, 8], strides = [1, 1, 1]} : vector<4x8x8xf32> to vector<1x8x8xf32>
    %70 = vector.shape_cast %69 : vector<1x8x8xf32> to vector<8x8xf32>
    %71 = vector.extract_strided_slice %66 {offsets = [2, 0, 0], sizes = [1, 8, 8], strides = [1, 1, 1]} : vector<4x8x8xf32> to vector<1x8x8xf32>
    %72 = vector.shape_cast %71 : vector<1x8x8xf32> to vector<8x8xf32>
    %73 = vector.extract_strided_slice %66 {offsets = [3, 0, 0], sizes = [1, 8, 8], strides = [1, 1, 1]} : vector<4x8x8xf32> to vector<1x8x8xf32>
    %74 = vector.shape_cast %73 : vector<1x8x8xf32> to vector<8x8xf32>
    %75 = tpu.concatenate %68, %70, %72, %74 in 1 : vector<8x8xf32>, vector<8x8xf32>, vector<8x8xf32>, vector<8x8xf32> -> vector<8x32xf32>
    %76 = arith.truncf %75 : vector<8x32xf32> to vector<8x32xbf16>
    %c0_20 = arith.constant 0 : index
    %c0_21 = arith.constant 0 : index
    %77 = vector.load %arg6[%c0_20, %c0_21] : memref<32x32xbf16, #tpu.memory_space<vmem>>, vector<32x32xbf16>
    %cst_22 = arith.constant dense<0.000000e+00> : vector<8x32xf32>
    %78 = tpu.matmul %76, %77, %cst_22 {dimension_numbers = #tpu.dot_dimension_numbers<[1], [0], [0], [1], [0, 0, 1, 1], [], []>} : vector<8x32xbf16>, vector<32x32xbf16>, vector<8x32xf32> -> vector<8x32xf32>
    %c0_23 = arith.constant 0 : index
    %c0_24 = arith.constant 0 : index
    %79 = vector.load %arg7[%c0_23, %c0_24] : memref<1x32xf32, #tpu.memory_space<vmem>>, vector<1x32xf32>
    %80 = vector.broadcast %79 : vector<1x32xf32> to vector<8x32xf32>
    %81 = arith.addf %78, %80 : vector<8x32xf32>
    %82 = arith.addf %3, %81 : vector<8x32xf32>
    %cst_25 = arith.constant dense<0.000000e+00> : vector<8xf32>
    %83 = vector.multi_reduction <add>, %82, %cst_25 [1] : vector<8x32xf32> to vector<8xf32>
    %84 = vector.shape_cast %83 : vector<8xf32> to vector<8x1xf32>
    %cst_26 = arith.constant 3.200000e+01 : f32
    %85 = vector.broadcast %cst_26 : f32 to vector<8x1xf32>
    %86 = arith.divf %84, %85 : vector<8x1xf32>
    %87 = vector.broadcast %86 : vector<8x1xf32> to vector<8x32xf32>
    %88 = arith.subf %82, %87 : vector<8x32xf32>
    %89 = arith.mulf %88, %88 : vector<8x32xf32>
    %cst_27 = arith.constant dense<0.000000e+00> : vector<8xf32>
    %90 = vector.multi_reduction <add>, %89, %cst_27 [1] : vector<8x32xf32> to vector<8xf32>
    %91 = vector.shape_cast %90 : vector<8xf32> to vector<8x1xf32>
    %cst_28 = arith.constant 3.200000e+01 : f32
    %92 = vector.broadcast %cst_28 : f32 to vector<8x1xf32>
    %93 = arith.divf %91, %92 : vector<8x1xf32>
    %94 = vector.broadcast %86 : vector<8x1xf32> to vector<8x32xf32>
    %95 = arith.subf %82, %94 : vector<8x32xf32>
    %cst_29 = arith.constant 9.99999974E-6 : f32
    %96 = vector.broadcast %cst_29 : f32 to vector<8x1xf32>
    %97 = arith.addf %93, %96 : vector<8x1xf32>
    %98 = math.rsqrt %97 : vector<8x1xf32>
    %99 = vector.broadcast %98 : vector<8x1xf32> to vector<8x32xf32>
    %100 = arith.mulf %95, %99 : vector<8x32xf32>
    %101 = vector.broadcast %9 : vector<1x32xf32> to vector<8x32xf32>
    %102 = arith.mulf %100, %101 : vector<8x32xf32>
    %103 = vector.broadcast %10 : vector<1x32xf32> to vector<8x32xf32>
    %104 = arith.addf %102, %103 : vector<8x32xf32>
    %105 = arith.truncf %104 : vector<8x32xf32> to vector<8x32xbf16>
    %c0_30 = arith.constant 0 : index
    %c0_31 = arith.constant 0 : index
    %106 = vector.load %arg10[%c0_30, %c0_31] : memref<32x64xbf16, #tpu.memory_space<vmem>>, vector<32x64xbf16>
    %cst_32 = arith.constant dense<0.000000e+00> : vector<8x64xf32>
    %107 = tpu.matmul %105, %106, %cst_32 {dimension_numbers = #tpu.dot_dimension_numbers<[1], [0], [0], [1], [0, 0, 1, 1], [], []>} : vector<8x32xbf16>, vector<32x64xbf16>, vector<8x64xf32> -> vector<8x64xf32>
    %c0_33 = arith.constant 0 : index
    %c0_34 = arith.constant 0 : index
    %108 = vector.load %arg11[%c0_33, %c0_34] : memref<1x64xf32, #tpu.memory_space<vmem>>, vector<1x64xf32>
    %109 = vector.broadcast %108 : vector<1x64xf32> to vector<8x64xf32>
    %110 = arith.addf %107, %109 : vector<8x64xf32>
    %cst_35 = arith.constant 0.000000e+00 : f32
    %111 = vector.broadcast %cst_35 : f32 to vector<8x64xf32>
    %112 = arith.maximumf %110, %111 : vector<8x64xf32>
    %113 = arith.truncf %112 : vector<8x64xf32> to vector<8x64xbf16>
    %c0_36 = arith.constant 0 : index
    %c0_37 = arith.constant 0 : index
    %114 = vector.load %arg12[%c0_36, %c0_37] : memref<64x32xbf16, #tpu.memory_space<vmem>>, vector<64x32xbf16>
    %cst_38 = arith.constant dense<0.000000e+00> : vector<8x32xf32>
    %115 = tpu.matmul %113, %114, %cst_38 {dimension_numbers = #tpu.dot_dimension_numbers<[1], [0], [0], [1], [0, 0, 1, 1], [], []>} : vector<8x64xbf16>, vector<64x32xbf16>, vector<8x32xf32> -> vector<8x32xf32>
    %c0_39 = arith.constant 0 : index
    %c0_40 = arith.constant 0 : index
    %116 = vector.load %arg13[%c0_39, %c0_40] : memref<1x32xf32, #tpu.memory_space<vmem>>, vector<1x32xf32>
    %117 = vector.broadcast %116 : vector<1x32xf32> to vector<8x32xf32>
    %118 = arith.addf %115, %117 : vector<8x32xf32>
    %119 = arith.addf %104, %118 : vector<8x32xf32>
    %cst_41 = arith.constant dense<0.000000e+00> : vector<8xf32>
    %120 = vector.multi_reduction <add>, %119, %cst_41 [1] : vector<8x32xf32> to vector<8xf32>
    %121 = vector.shape_cast %120 : vector<8xf32> to vector<8x1xf32>
    %cst_42 = arith.constant 3.200000e+01 : f32
    %122 = vector.broadcast %cst_42 : f32 to vector<8x1xf32>
    %123 = arith.divf %121, %122 : vector<8x1xf32>
    %124 = vector.broadcast %123 : vector<8x1xf32> to vector<8x32xf32>
    %125 = arith.subf %119, %124 : vector<8x32xf32>
    %126 = arith.mulf %125, %125 : vector<8x32xf32>
    %cst_43 = arith.constant dense<0.000000e+00> : vector<8xf32>
    %127 = vector.multi_reduction <add>, %126, %cst_43 [1] : vector<8x32xf32> to vector<8xf32>
    %128 = vector.shape_cast %127 : vector<8xf32> to vector<8x1xf32>
    %cst_44 = arith.constant 3.200000e+01 : f32
    %129 = vector.broadcast %cst_44 : f32 to vector<8x1xf32>
    %130 = arith.divf %128, %129 : vector<8x1xf32>
    %131 = vector.broadcast %123 : vector<8x1xf32> to vector<8x32xf32>
    %132 = arith.subf %119, %131 : vector<8x32xf32>
    %cst_45 = arith.constant 9.99999974E-6 : f32
    %133 = vector.broadcast %cst_45 : f32 to vector<8x1xf32>
    %134 = arith.addf %130, %133 : vector<8x1xf32>
    %135 = math.rsqrt %134 : vector<8x1xf32>
    %136 = vector.broadcast %135 : vector<8x1xf32> to vector<8x32xf32>
    %137 = arith.mulf %132, %136 : vector<8x32xf32>
    %138 = vector.broadcast %9 : vector<1x32xf32> to vector<8x32xf32>
    %139 = arith.mulf %137, %138 : vector<8x32xf32>
    %140 = vector.broadcast %10 : vector<1x32xf32> to vector<8x32xf32>
    %141 = arith.addf %139, %140 : vector<8x32xf32>
    %c0_46 = arith.constant 0 : index
    %c0_47 = arith.constant 0 : index
    %142 = vector.load %arg15[%c0_46, %c0_47] : memref<8x32xf32, #tpu.memory_space<vmem>>, vector<8x32xf32>
    tpu.vector_store %arg15[%c0_46, %c0_47], %141 {strides = array<i32>} : memref<8x32xf32, #tpu.memory_space<vmem>>, vector<8x32xf32>,
    %c1_i32 = arith.constant 1 : i32
    %143 = arith.cmpi eq, %arg1, %c1_i32 : i32
    %144 = arith.extui %143 : i1 to i32
    %c0_i32_48 = arith.constant 0 : i32
    %145 = arith.cmpi ne, %144, %c0_i32_48 : i32
    scf.if %145 {
      %c0_49 = arith.constant 0 : index
      %c0_50 = arith.constant 0 : index
      %c0_51 = arith.constant 0 : index
      %146 = vector.load %arg14[%c0_49, %c0_50, %c0_51] : memref<1x8x32xf32, #tpu.memory_space<vmem>>, vector<1x8x32xf32>
      %147 = vector.shape_cast %146 : vector<1x8x32xf32> to vector<8x32xf32>
      %148 = vector.shape_cast %141 : vector<8x32xf32> to vector<1x8x32xf32>
      tpu.vector_store %arg14[%c0_49, %c0_50, %c0_51], %148 {strides = array<i32>} : memref<1x8x32xf32, #tpu.memory_space<vmem>>, vector<1x8x32xf32>,
    } else {
    }
    return
  }
  func.func @transform_0(%arg0: i32, %arg1: i32) -> (i32, i32, i32) {
    %c0_i32 = arith.constant 0 : i32
    %c0_i32_0 = arith.constant 0 : i32
    %c0_i32_1 = arith.constant 0 : i32
    return %arg0, %c0_i32, %c0_i32_0 : i32, i32, i32
  }
  func.func @transform_1(%arg0: i32, %arg1: i32) -> (i32, i32, i32) {
    %c0_i32 = arith.constant 0 : i32
    %c0_i32_0 = arith.constant 0 : i32
    %c0_i32_1 = arith.constant 0 : i32
    return %arg0, %c0_i32, %c0_i32_0 : i32, i32, i32
  }
  func.func @transform_2(%arg0: i32, %arg1: i32) -> (i32, i32) {
    %c0_i32 = arith.constant 0 : i32
    %c0_i32_0 = arith.constant 0 : i32
    %c0_i32_1 = arith.constant 0 : i32
    return %c0_i32, %c0_i32_0 : i32, i32
  }
  func.func @transform_3(%arg0: i32, %arg1: i32) -> (i32, i32) {
    %c0_i32 = arith.constant 0 : i32
    %c0_i32_0 = arith.constant 0 : i32
    %c0_i32_1 = arith.constant 0 : i32
    return %c0_i32, %c0_i32_0 : i32, i32
  }
  func.func @transform_4(%arg0: i32, %arg1: i32) -> (i32, i32) {
    %c0_i32 = arith.constant 0 : i32
    %c0_i32_0 = arith.constant 0 : i32
    %c0_i32_1 = arith.constant 0 : i32
    return %c0_i32, %c0_i32_0 : i32, i32
  }
  func.func @transform_5(%arg0: i32, %arg1: i32) -> (i32, i32) {
    %c0_i32 = arith.constant 0 : i32
    %c0_i32_0 = arith.constant 0 : i32
    %c0_i32_1 = arith.constant 0 : i32
    return %c0_i32, %c0_i32_0 : i32, i32
  }
  func.func @transform_6(%arg0: i32, %arg1: i32) -> (i32, i32) {
    %c0_i32 = arith.constant 0 : i32
    %c0_i32_0 = arith.constant 0 : i32
    %c0_i32_1 = arith.constant 0 : i32
    return %c0_i32, %c0_i32_0 : i32, i32
  }
  func.func @transform_7(%arg0: i32, %arg1: i32) -> (i32, i32) {
    %c0_i32 = arith.constant 0 : i32
    %c0_i32_0 = arith.constant 0 : i32
    %c0_i32_1 = arith.constant 0 : i32
    return %c0_i32, %c0_i32_0 : i32, i32
  }
  func.func @transform_8(%arg0: i32, %arg1: i32) -> (i32, i32) {
    %c0_i32 = arith.constant 0 : i32
    %c0_i32_0 = arith.constant 0 : i32
    %c0_i32_1 = arith.constant 0 : i32
    return %c0_i32, %c0_i32_0 : i32, i32
  }
  func.func @transform_9(%arg0: i32, %arg1: i32) -> (i32, i32) {
    %c0_i32 = arith.constant 0 : i32
    %c0_i32_0 = arith.constant 0 : i32
    %c0_i32_1 = arith.constant 0 : i32
    return %c0_i32, %c0_i32_0 : i32, i32
  }
  func.func @transform_10(%arg0: i32, %arg1: i32) -> (i32, i32) {
    %c0_i32 = arith.constant 0 : i32
    %c0_i32_0 = arith.constant 0 : i32
    %c0_i32_1 = arith.constant 0 : i32
    return %c0_i32, %c0_i32_0 : i32, i32
  }
  func.func @transform_11(%arg0: i32, %arg1: i32) -> (i32, i32) {
    %c0_i32 = arith.constant 0 : i32
    %c0_i32_0 = arith.constant 0 : i32
    %c0_i32_1 = arith.constant 0 : i32
    return %c0_i32, %c0_i32_0 : i32, i32
  }
  func.func @transform_12(%arg0: i32, %arg1: i32) -> (i32, i32, i32) {
    %c0_i32 = arith.constant 0 : i32
    %c0_i32_0 = arith.constant 0 : i32
    %c0_i32_1 = arith.constant 0 : i32
    return %arg0, %c0_i32, %c0_i32_0 : i32, i32, i32
  }
}

</mosaic_0001>

<llo_original>
// kernel: tpu_custom_call.1
$region0: #{tpu_custom_call.1}
  #allocation0 [shape = 'u32[]', space=smem, size = 0x4, offset = 0x4, fixed_abs, tag = 'smem constant byte address 0x4 - core index']
  #allocation1 [shape = 'u32[144,128]{1,0:T(1,128)}', space=vmem, size = 0x12000, scoped, tag = 'internal scratch']
  #allocation2 [shape = 'f32[8,32]{1,0:T(8,128)}', space=vmem, size = 0x1000, scoped, tag = 'scratch operand']
  %s0 = inlined_call_operand.vmem [shape: f32[2,8,32], index: 0, kind: input, shape index: {}]
  %s1 = inlined_call_operand.hbm [shape: f32[2,1,8], index: 1, kind: input, shape index: {}]
  %s2 = inlined_call_operand.vmem [shape: bf16[32,96], index: 2, kind: input, shape index: {}]
  %s3 = inlined_call_operand.vmem [shape: f32[1,96], index: 3, kind: input, shape index: {}]
  %s4 = inlined_call_operand.vmem [shape: bf16[32,32], index: 4, kind: input, shape index: {}]
  %s5 = inlined_call_operand.vmem [shape: f32[1,32], index: 5, kind: input, shape index: {}]
  %s6 = inlined_call_operand.hbm [shape: f32[1,32], index: 6, kind: input, shape index: {}]
  %s7 = inlined_call_operand.hbm [shape: f32[1,32], index: 7, kind: input, shape index: {}]
  %s8 = inlined_call_operand.hbm [shape: bf16[32,64], index: 8, kind: input, shape index: {}]
  %s9 = inlined_call_operand.hbm [shape: f32[1,64], index: 9, kind: input, shape index: {}]
  %s10 = inlined_call_operand.vmem [shape: bf16[64,32], index: 10, kind: input, shape index: {}]
  %s11 = inlined_call_operand.vmem [shape: f32[1,32], index: 11, kind: input, shape index: {}]
  %s12 = inlined_call_operand.hbm [shape: f32[2,8,32], index: 12, kind: output, shape index: {}]
  %s13 = sld [smem:[#allocation0]]
  $region109: #{tpu_custom_call.1} parent=0
    _
  %s15 = ssub.s32 1, %s13
  %s16 = scalar_select 0, %s15, %s13
  $region1: #{tpu_custom_call.1} parent=0
    #allocation3 [shape = 'u8[1024]{0}', space=vmem, size = 0x400, scoped, tag = 'input window, operand 1']
    #allocation4 [shape = 's32[2]{0}', space=sflag, size = 0x8, scoped, tag = 'scoped memory for tpu_custom_call.1']
    #allocation5 [shape = 's32[2]{0}', space=sflag, size = 0x8, scoped, tag = 'scoped memory for tpu_custom_call.1']
    #allocation6 [shape = 'u8[512]{0}', space=vmem, size = 0x400, scoped, tag = 'input window, operand 6, single buffered']
    #allocation7 [shape = 's32[1]{0}', space=sflag, size = 0x4, scoped, tag = 'scoped memory for tpu_custom_call.1']
    #allocation8 [shape = 'u8[512]{0}', space=vmem, size = 0x400, scoped, tag = 'input window, operand 7, single buffered']
    #allocation9 [shape = 'u8[8192]{0}', space=vmem, size = 0x2000, scoped, tag = 'input window, operand 8, single buffered']
    #allocation10 [shape = 's32[1]{0}', space=sflag, size = 0x4, scoped, tag = 'scoped memory for tpu_custom_call.1']
    #allocation11 [shape = 'u8[512]{0}', space=vmem, size = 0x400, scoped, tag = 'input window, operand 9, single buffered']
    #allocation12 [shape = 'u8[8192]{0}', space=vmem, size = 0x2000, scoped, tag = 'output window, operand 0']
    %17 = vsyncpa [#allocation4], 0
    %s18 = scalar_lea.sflag [#allocation4], 1
    %19 = vsyncpa %s18, 0
    %20 = vsyncpa [#allocation7], 0
    %21 = vsyncpa [#allocation10], 0
    %22 = vsyncpa [#allocation5], 0
    %s23 = scalar_lea.sflag [#allocation5], 1
    %24 = vsyncpa %s23, 0
    loop: start=0, step=1, limit=6
    $region2: #{tpu_custom_call.1} parent=1 // loop_pre_header
      _
    $region3: #{tpu_custom_call.1} parent=1 // loop_header
      %s26 = sphi 0, %s30
      %p27 = scmp.ge.s32.totalorder %s26, 6
      %s33 = sphi 0, %s45
      %s34 = sphi 0, %s41
      %s35 = sphi 0, %s33
      %s36 = sphi 0, %s34
      %s37 = sphi 0, %s35
      %s38 = sphi 0, %s36
      %s48 = sphi 0, %s50
      %s51 = sphi 0, %s48
      %s52 = sphi 0, %s51
      %s68 = sphi 0, %s52
      %s74 = sphi 0, %s76
      %s77 = sphi 0, %s74
      %s78 = sphi 0, %s77
      %s94 = sphi 0, %s78
      %s98 = sphi 0, %s98
      %s100 = sphi 0, %s98
      %s101 = sphi 0, %s100
      %s115 = sphi 0, %s101
      %s119 = sphi 0, %s119
      %s121 = sphi 0, %s119
      %s122 = sphi 0, %s121
      %s136 = sphi 0, %s122
      %s140 = sphi 0, %s140
      %s142 = sphi 0, %s140
      %s143 = sphi 0, %s142
      %s157 = sphi 0, %s143
      %s161 = sphi 0, %s161
      %s163 = sphi 0, %s161
      %s164 = sphi 0, %s163
      %s178 = sphi 0, %s164
      %s182 = sphi 0, %s182
      %s184 = sphi 0, %s182
      %s185 = sphi 0, %s184
      %s199 = sphi 0, %s185
      %s203 = sphi 0, %s203
      %s205 = sphi 0, %s203
      %s206 = sphi 0, %s205
      %s220 = sphi 0, %s206
      %s224 = sphi 0, %s224
      %s226 = sphi 0, %s224
      %s227 = sphi 0, %s226
      %s241 = sphi 0, %s227
      %s245 = sphi 0, %s245
      %s247 = sphi 0, %s245
      %s248 = sphi 0, %s247
      %s262 = sphi 0, %s248
      %s266 = sphi 0, %s266
      %s268 = sphi 0, %s266
      %s269 = sphi 0, %s268
      %s283 = sphi 0, %s269
      %s287 = sphi 0, %s287
      %s289 = sphi 0, %s287
      %s290 = sphi 0, %s289
      %s304 = sphi 0, %s290
      %s310 = sphi 0, %s312
      %s313 = sphi 0, %s310
      %s314 = sphi 0, %s313
      %s330 = sphi 0, %s314
    $region4: #{tpu_custom_call.1} parent=1 // loop_header_branch
      %29 = sbr.rel (%p27) target = $region8
    $region5: #{tpu_custom_call.1} parent=1 // loop_body
      %s31 = ssub.s32 %s26, 1
      %s32 = ssub.s32 %s26, 2
      %s39 = sadd.s32 1, %s34
      %p40 = scmp.ge.s32.totalorder %s39, 2
      %s41 = scalar_select %p40, 0, %s39
      %s42 = sadd.s32 1, %s33
      %s43 = scalar_select %p40, %s42, %s33
      %p44 = scmp.ge.s32.totalorder %s43, 2
      %s45 = scalar_select %p44, 0, %s43
      %s46 = ssub.s32 %s33, %s45
      %p47 = scmp.eq.s32.totalorder %s46, 0
      %s49 = sadd.s32 %s48, 1
      %s50 = scalar_select %p47, %s48, %s49
      %p53 = pneg %p47
      %p54 = scmp.eq.s32.totalorder %s26, 3
      %p55 = por %p53, %p54
      %p56 = scmp.ne.s32.totalorder %s48, %s51
      %p57 = scmp.eq.s32.totalorder %s26, 0
      %p58 = por %p56, %p57
      %p59 = scmp.ne.s32.totalorder %s48, %s51
      %p60 = scmp.eq.s32.totalorder %s31, 3
      %p61 = por %p59, %p60
      %p62 = scmp.ne.s32.totalorder %s51, %s52
      %p63 = scmp.eq.s32.totalorder %s31, 0
      %p64 = por %p62, %p63
      %p65 = scmp.ne.s32.totalorder %s51, %s52
      %p66 = scmp.eq.s32.totalorder %s32, 3
      %p67 = por %p65, %p66
      %p69 = scmp.ne.s32.totalorder %s52, %s68
      %p70 = scmp.eq.s32.totalorder %s32, 0
      %p71 = por %p69, %p70
      %s72 = ssub.s32 %s33, %s45
      %p73 = scmp.eq.s32.totalorder %s72, 0
      %s75 = sadd.s32 %s74, 1
      %s76 = scalar_select %p73, %s74, %s75
      %p79 = pneg %p73
      %p80 = scmp.eq.s32.totalorder %s26, 3
      %p81 = por %p79, %p80
      %p82 = scmp.ne.s32.totalorder %s74, %s77
      %p83 = scmp.eq.s32.totalorder %s26, 0
      %p84 = por %p82, %p83
      %p85 = scmp.ne.s32.totalorder %s74, %s77
      %p86 = scmp.eq.s32.totalorder %s31, 3
      %p87 = por %p85, %p86
      %p88 = scmp.ne.s32.totalorder %s77, %s78
      %p89 = scmp.eq.s32.totalorder %s31, 0
      %p90 = por %p88, %p89
      %p91 = scmp.ne.s32.totalorder %s77, %s78
      %p92 = scmp.eq.s32.totalorder %s32, 3
      %p93 = por %p91, %p92
      %p95 = scmp.ne.s32.totalorder %s78, %s94
      %p96 = scmp.eq.s32.totalorder %s32, 0
      %p97 = por %p95, %p96
      %s99 = sadd.s32 %s98, 1
      %p102 = scmp.eq.s32.totalorder %s26, 3
      %p103 = scmp.ne.s32.totalorder %s98, %s100
      %p104 = scmp.eq.s32.totalorder %s26, 0
      %p105 = por %p103, %p104
      %p106 = scmp.ne.s32.totalorder %s98, %s100
      %p107 = scmp.eq.s32.totalorder %s31, 3
      %p108 = por %p106, %p107
      %p109 = scmp.ne.s32.totalorder %s100, %s101
      %p110 = scmp.eq.s32.totalorder %s31, 0
      %p111 = por %p109, %p110
      %p112 = scmp.ne.s32.totalorder %s100, %s101
      %p113 = scmp.eq.s32.totalorder %s32, 3
      %p114 = por %p112, %p113
      %p116 = scmp.ne.s32.totalorder %s101, %s115
      %p117 = scmp.eq.s32.totalorder %s32, 0
      %p118 = por %p116, %p117
      %s120 = sadd.s32 %s119, 1
      %p123 = scmp.eq.s32.totalorder %s26, 3
      %p124 = scmp.ne.s32.totalorder %s119, %s121
      %p125 = scmp.eq.s32.totalorder %s26, 0
      %p126 = por %p124, %p125
      %p127 = scmp.ne.s32.totalorder %s119, %s121
      %p128 = scmp.eq.s32.totalorder %s31, 3
      %p129 = por %p127, %p128
      %p130 = scmp.ne.s32.totalorder %s121, %s122
      %p131 = scmp.eq.s32.totalorder %s31, 0
      %p132 = por %p130, %p131
      %p133 = scmp.ne.s32.totalorder %s121, %s122
      %p134 = scmp.eq.s32.totalorder %s32, 3
      %p135 = por %p133, %p134
      %p137 = scmp.ne.s32.totalorder %s122, %s136
      %p138 = scmp.eq.s32.totalorder %s32, 0
      %p139 = por %p137, %p138
      %s141 = sadd.s32 %s140, 1
      %p144 = scmp.eq.s32.totalorder %s26, 3
      %p145 = scmp.ne.s32.totalorder %s140, %s142
      %p146 = scmp.eq.s32.totalorder %s26, 0
      %p147 = por %p145, %p146
      %p148 = scmp.ne.s32.totalorder %s140, %s142
      %p149 = scmp.eq.s32.totalorder %s31, 3
      %p150 = por %p148, %p149
      %p151 = scmp.ne.s32.totalorder %s142, %s143
      %p152 = scmp.eq.s32.totalorder %s31, 0
      %p153 = por %p151, %p152
      %p154 = scmp.ne.s32.totalorder %s142, %s143
      %p155 = scmp.eq.s32.totalorder %s32, 3
      %p156 = por %p154, %p155
      %p158 = scmp.ne.s32.totalorder %s143, %s157
      %p159 = scmp.eq.s32.totalorder %s32, 0
      %p160 = por %p158, %p159
      %s162 = sadd.s32 %s161, 1
      %p165 = scmp.eq.s32.totalorder %s26, 3
      %p166 = scmp.ne.s32.totalorder %s161, %s163
      %p167 = scmp.eq.s32.totalorder %s26, 0
      %p168 = por %p166, %p167
      %p169 = scmp.ne.s32.totalorder %s161, %s163
      %p170 = scmp.eq.s32.totalorder %s31, 3
      %p171 = por %p169, %p170
      %p172 = scmp.ne.s32.totalorder %s163, %s164
      %p173 = scmp.eq.s32.totalorder %s31, 0
      %p174 = por %p172, %p173
      %p175 = scmp.ne.s32.totalorder %s163, %s164
      %p176 = scmp.eq.s32.totalorder %s32, 3
      %p177 = por %p175, %p176
      %p179 = scmp.ne.s32.totalorder %s164, %s178
      %p180 = scmp.eq.s32.totalorder %s32, 0
      %p181 = por %p179, %p180
      %s183 = sadd.s32 %s182, 1
      %p186 = scmp.eq.s32.totalorder %s26, 3
      %p187 = scmp.ne.s32.totalorder %s182, %s184
      %p188 = scmp.eq.s32.totalorder %s26, 0
      %p189 = por %p187, %p188
      %p190 = scmp.ne.s32.totalorder %s182, %s184
      %p191 = scmp.eq.s32.totalorder %s31, 3
      %p192 = por %p190, %p191
      %p193 = scmp.ne.s32.totalorder %s184, %s185
      %p194 = scmp.eq.s32.totalorder %s31, 0
      %p195 = por %p193, %p194
      %p196 = scmp.ne.s32.totalorder %s184, %s185
      %p197 = scmp.eq.s32.totalorder %s32, 3
      %p198 = por %p196, %p197
      %p200 = scmp.ne.s32.totalorder %s185, %s199
      %p201 = scmp.eq.s32.totalorder %s32, 0
      %p202 = por %p200, %p201
      %s204 = sadd.s32 %s203, 1
      %p207 = scmp.eq.s32.totalorder %s26, 3
      %p208 = scmp.ne.s32.totalorder %s203, %s205
      %p209 = scmp.eq.s32.totalorder %s26, 0
      %p210 = por %p208, %p209
      %p211 = scmp.ne.s32.totalorder %s203, %s205
      %p212 = scmp.eq.s32.totalorder %s31, 3
      %p213 = por %p211, %p212
      %p214 = scmp.ne.s32.totalorder %s205, %s206
      %p215 = scmp.eq.s32.totalorder %s31, 0
      %p216 = por %p214, %p215
      %p217 = scmp.ne.s32.totalorder %s205, %s206
      %p218 = scmp.eq.s32.totalorder %s32, 3
      %p219 = por %p217, %p218
      %p221 = scmp.ne.s32.totalorder %s206, %s220
      %p222 = scmp.eq.s32.totalorder %s32, 0
      %p223 = por %p221, %p222
      %s225 = sadd.s32 %s224, 1
      %p228 = scmp.eq.s32.totalorder %s26, 3
      %p229 = scmp.ne.s32.totalorder %s224, %s226
      %p230 = scmp.eq.s32.totalorder %s26, 0
      %p231 = por %p229, %p230
      %p232 = scmp.ne.s32.totalorder %s224, %s226
      %p233 = scmp.eq.s32.totalorder %s31, 3
      %p234 = por %p232, %p233
      %p235 = scmp.ne.s32.totalorder %s226, %s227
      %p236 = scmp.eq.s32.totalorder %s31, 0
      %p237 = por %p235, %p236
      %p238 = scmp.ne.s32.totalorder %s226, %s227
      %p239 = scmp.eq.s32.totalorder %s32, 3
      %p240 = por %p238, %p239
      %p242 = scmp.ne.s32.totalorder %s227, %s241
      %p243 = scmp.eq.s32.totalorder %s32, 0
      %p244 = por %p242, %p243
      %s246 = sadd.s32 %s245, 1
      %p249 = scmp.eq.s32.totalorder %s26, 3
      %p250 = scmp.ne.s32.totalorder %s245, %s247
      %p251 = scmp.eq.s32.totalorder %s26, 0
      %p252 = por %p250, %p251
      %p253 = scmp.ne.s32.totalorder %s245, %s247
      %p254 = scmp.eq.s32.totalorder %s31, 3
      %p255 = por %p253, %p254
      %p256 = scmp.ne.s32.totalorder %s247, %s248
      %p257 = scmp.eq.s32.totalorder %s31, 0
      %p258 = por %p256, %p257
      %p259 = scmp.ne.s32.totalorder %s247, %s248
      %p260 = scmp.eq.s32.totalorder %s32, 3
      %p261 = por %p259, %p260
      %p263 = scmp.ne.s32.totalorder %s248, %s262
      %p264 = scmp.eq.s32.totalorder %s32, 0
      %p265 = por %p263, %p264
      %s267 = sadd.s32 %s266, 1
      %p270 = scmp.eq.s32.totalorder %s26, 3
      %p271 = scmp.ne.s32.totalorder %s266, %s268
      %p272 = scmp.eq.s32.totalorder %s26, 0
      %p273 = por %p271, %p272
      %p274 = scmp.ne.s32.totalorder %s266, %s268
      %p275 = scmp.eq.s32.totalorder %s31, 3
      %p276 = por %p274, %p275
      %p277 = scmp.ne.s32.totalorder %s268, %s269
      %p278 = scmp.eq.s32.totalorder %s31, 0
      %p279 = por %p277, %p278
      %p280 = scmp.ne.s32.totalorder %s268, %s269
      %p281 = scmp.eq.s32.totalorder %s32, 3
      %p282 = por %p280, %p281
      %p284 = scmp.ne.s32.totalorder %s269, %s283
      %p285 = scmp.eq.s32.totalorder %s32, 0
      %p286 = por %p284, %p285
      %s288 = sadd.s32 %s287, 1
      %p291 = scmp.eq.s32.totalorder %s26, 3
      %p292 = scmp.ne.s32.totalorder %s287, %s289
      %p293 = scmp.eq.s32.totalorder %s26, 0
      %p294 = por %p292, %p293
      %p295 = scmp.ne.s32.totalorder %s287, %s289
      %p296 = scmp.eq.s32.totalorder %s31, 3
      %p297 = por %p295, %p296
      %p298 = scmp.ne.s32.totalorder %s289, %s290
      %p299 = scmp.eq.s32.totalorder %s31, 0
      %p300 = por %p298, %p299
      %p301 = scmp.ne.s32.totalorder %s289, %s290
      %p302 = scmp.eq.s32.totalorder %s32, 3
      %p303 = por %p301, %p302
      %p305 = scmp.ne.s32.totalorder %s290, %s304
      %p306 = scmp.eq.s32.totalorder %s32, 0
      %p307 = por %p305, %p306
      %s308 = ssub.s32 %s33, %s45
      %p309 = scmp.eq.s32.totalorder %s308, 0
      %s311 = sadd.s32 %s310, 1
      %s312 = scalar_select %p309, %s310, %s311
      %p315 = pneg %p309
      %p316 = scmp.eq.s32.totalorder %s26, 3
      %p317 = por %p315, %p316
      %p318 = scmp.ne.s32.totalorder %s310, %s313
      %p319 = scmp.eq.s32.totalorder %s26, 0
      %p320 = por %p318, %p319
      %p321 = scmp.ne.s32.totalorder %s310, %s313
      %p322 = scmp.eq.s32.totalorder %s31, 3
      %p323 = por %p321, %p322
      %p324 = scmp.ne.s32.totalorder %s313, %s314
      %p325 = scmp.eq.s32.totalorder %s31, 0
      %p326 = por %p324, %p325
      %p327 = scmp.ne.s32.totalorder %s313, %s314
      %p328 = scmp.eq.s32.totalorder %s32, 3
      %p329 = por %p327, %p328
      %p331 = scmp.ne.s32.totalorder %s314, %s330
      %p332 = scmp.eq.s32.totalorder %s32, 0
      %p333 = por %p331, %p332
      %p334 = scmp.le.s32.totalorder 1, %s26
      %p335 = scmp.lt.s32.totalorder %s26, 5
      %p336 = pnand %p334, %p335
      %p337 = pneg %p336
      // Predicated region
      $region9: #{tpu_custom_call.1} parent=5 // pred_check
        _
      $region10: #{tpu_custom_call.1} parent=5 // pred_check_branch
        %339 = sbr.rel (%p336) target = $region12
      $region11: #{tpu_custom_call.1} parent=5 // pred_region
        %s340 = ssub.s32 %s26, 1
        // Predicated region
        $region13: #{tpu_custom_call.1} parent=11 // pred_check
          %p341 = pneg %p111
        $region14: #{tpu_custom_call.1} parent=11 // pred_check_branch
          %343 = sbr.rel (%p341) target = $region16
        $region15: #{tpu_custom_call.1} parent=11 // pred_region
          _
        $region16: #{tpu_custom_call.1} parent=11 // pred_fallthru
          _
        // Predicated region
        $region17: #{tpu_custom_call.1} parent=11 // pred_check
          %p344 = pneg %p132
        $region18: #{tpu_custom_call.1} parent=11 // pred_check_branch
          %346 = sbr.rel (%p344) target = $region20
        $region19: #{tpu_custom_call.1} parent=11 // pred_region
          _
        $region20: #{tpu_custom_call.1} parent=11 // pred_fallthru
          _
        // Predicated region
        $region21: #{tpu_custom_call.1} parent=11 // pred_check
          %p347 = pneg %p153
        $region22: #{tpu_custom_call.1} parent=11 // pred_check_branch
          %349 = sbr.rel (%p347) target = $region24
        $region23: #{tpu_custom_call.1} parent=11 // pred_region
          _
        $region24: #{tpu_custom_call.1} parent=11 // pred_fallthru
          _
        // Predicated region
        $region25: #{tpu_custom_call.1} parent=11 // pred_check
          %p350 = pneg %p174
        $region26: #{tpu_custom_call.1} parent=11 // pred_check_branch
          %352 = sbr.rel (%p350) target = $region28
        $region27: #{tpu_custom_call.1} parent=11 // pred_region
          _
        $region28: #{tpu_custom_call.1} parent=11 // pred_fallthru
          _
        // Predicated region
        $region29: #{tpu_custom_call.1} parent=11 // pred_check
          %p353 = pneg %p195
        $region30: #{tpu_custom_call.1} parent=11 // pred_check_branch
          %355 = sbr.rel (%p353) target = $region32
        $region31: #{tpu_custom_call.1} parent=11 // pred_region
          %s357 = ssub.s32 16, 16
          %358 = vsyncadd [#allocation7], %s357
          %s360 = sshll.u32 [#allocation6], 4
          %s361 = int_to_ptr.vmem [resolvable:$true] %s360
          %363 = dma.hbm_to_vmem [thread:$0]  %s6, 16, %s361, [#allocation7]
        $region32: #{tpu_custom_call.1} parent=11 // pred_fallthru
          _
        // Predicated region
        $region33: #{tpu_custom_call.1} parent=11 // pred_check
          %p364 = pneg %p216
        $region34: #{tpu_custom_call.1} parent=11 // pred_check_branch
          %366 = sbr.rel (%p364) target = $region36
        $region35: #{tpu_custom_call.1} parent=11 // pred_region
          %s368 = ssub.s32 16, 16
          %369 = vsyncadd [#allocation7], %s368
          %s371 = sshll.u32 [#allocation8], 4
          %s372 = int_to_ptr.vmem [resolvable:$true] %s371
          %374 = dma.hbm_to_vmem [thread:$0]  %s7, 16, %s372, [#allocation7]
        $region36: #{tpu_custom_call.1} parent=11 // pred_fallthru
          _
        // Predicated region
        $region37: #{tpu_custom_call.1} parent=11 // pred_check
          %p375 = pneg %p237
        $region38: #{tpu_custom_call.1} parent=11 // pred_check_branch
          %377 = sbr.rel (%p375) target = $region40
        $region39: #{tpu_custom_call.1} parent=11 // pred_region
          %s379 = ssub.s32 256, 256
          %380 = vsyncadd [#allocation10], %s379
          %s381 = sshll.u32 [#allocation9], 4
          %s382 = int_to_ptr.vmem [resolvable:$true] %s381
          %387 = dma.hbm_to_vmem [thread:$0]  %s8, 256, %s382, [#allocation10], 64, 64, 4
        $region40: #{tpu_custom_call.1} parent=11 // pred_fallthru
          _
        // Predicated region
        $region41: #{tpu_custom_call.1} parent=11 // pred_check
          %p388 = pneg %p258
        $region42: #{tpu_custom_call.1} parent=11 // pred_check_branch
          %390 = sbr.rel (%p388) target = $region44
        $region43: #{tpu_custom_call.1} parent=11 // pred_region
          %s392 = ssub.s32 16, 16
          %393 = vsyncadd [#allocation10], %s392
          %s395 = sshll.u32 [#allocation11], 4
          %s396 = int_to_ptr.vmem [resolvable:$true] %s395
          %398 = dma.hbm_to_vmem [thread:$0]  %s9, 16, %s396, [#allocation10]
        $region44: #{tpu_custom_call.1} parent=11 // pred_fallthru
          _
        // Predicated region
        $region45: #{tpu_custom_call.1} parent=11 // pred_check
          %p399 = pneg %p279
        $region46: #{tpu_custom_call.1} parent=11 // pred_check_branch
          %401 = sbr.rel (%p399) target = $region48
        $region47: #{tpu_custom_call.1} parent=11 // pred_region
          _
        $region48: #{tpu_custom_call.1} parent=11 // pred_fallthru
          _
        // Predicated region
        $region49: #{tpu_custom_call.1} parent=11 // pred_check
          %p402 = pneg %p300
        $region50: #{tpu_custom_call.1} parent=11 // pred_check_branch
          %404 = sbr.rel (%p402) target = $region52
        $region51: #{tpu_custom_call.1} parent=11 // pred_region
          _
        $region52: #{tpu_custom_call.1} parent=11 // pred_fallthru
          _
      $region12: #{tpu_custom_call.1} parent=5 // pred_fallthru
        _
      %p405 = scmp.lt.s32.totalorder %s26, 4
      // Predicated region
      $region53: #{tpu_custom_call.1} parent=5 // pred_check
        %p406 = pneg %p405
      $region54: #{tpu_custom_call.1} parent=5 // pred_check_branch
        %408 = sbr.rel (%p406) target = $region56
      $region55: #{tpu_custom_call.1} parent=5 // pred_region
        // Predicated region
        $region57: #{tpu_custom_call.1} parent=55 // pred_check
          %p409 = pneg %p58
        $region58: #{tpu_custom_call.1} parent=55 // pred_check_branch
          %411 = sbr.rel (%p409) target = $region60
        $region59: #{tpu_custom_call.1} parent=55 // pred_region
          %p412 = scmp.lt.s32.totalorder %s33, 1
          %s413 = scalar_select %p412, %s33, 1
          %s414 = smul.addr %s413, 8
          %s415 = scalar_lea.vmem %s0, %s414
        $region60: #{tpu_custom_call.1} parent=55 // pred_fallthru
          _
        // Predicated region
        $region61: #{tpu_custom_call.1} parent=55 // pred_check
          %p416 = pneg %p84
        $region62: #{tpu_custom_call.1} parent=55 // pred_check_branch
          %418 = sbr.rel (%p416) target = $region64
        $region63: #{tpu_custom_call.1} parent=55 // pred_region
          %s419 = sand.u32 %s74, 1
          %s420 = scalar_lea.sflag [#allocation4], %s419
          %s421 = sand.u32 %s74, 1
          %s422 = scalar_lea.vmem [#allocation3], %s421
          %s424 = ssub.s32 16, 16
          %425 = vsyncadd %s420, %s424
          %s426 = smul.addr %s33, 16
          %s427 = scalar_lea.hbm %s1, %s426
          %s429 = sshll.u32 %s422, 4
          %s430 = int_to_ptr.vmem [resolvable:$true] %s429
          %432 = dma.hbm_to_vmem [thread:$0]  %s427, 16, %s430, %s420
        $region64: #{tpu_custom_call.1} parent=55 // pred_fallthru
          _
      $region56: #{tpu_custom_call.1} parent=5 // pred_fallthru
        _
      %p433 = scmp.le.s32.totalorder 1, %s26
      %p434 = scmp.lt.s32.totalorder %s26, 5
      %p435 = pnand %p433, %p434
      %p436 = pneg %p435
      // Predicated region
      $region65: #{tpu_custom_call.1} parent=5 // pred_check
        _
      $region66: #{tpu_custom_call.1} parent=5 // pred_check_branch
        %438 = sbr.rel (%p435) target = $region68
      $region67: #{tpu_custom_call.1} parent=5 // pred_region
        %s439 = ssub.s32 %s26, 1
        %s440 = sand.u32 %s77, 1
        %s441 = scalar_lea.sflag [#allocation4], %s440
        %s442 = sand.u32 %s77, 1
        %s443 = scalar_lea.vmem [#allocation3], %s442
        // Predicated region
        $region69: #{tpu_custom_call.1} parent=67 // pred_check
          %p444 = pneg %p90
        $region70: #{tpu_custom_call.1} parent=67 // pred_check_branch
          %446 = sbr.rel (%p444) target = $region72
        $region71: #{tpu_custom_call.1} parent=67 // pred_region
          %447 = dma.done %s441, 16
        $region72: #{tpu_custom_call.1} parent=67 // pred_fallthru
          _
        // Predicated region
        $region73: #{tpu_custom_call.1} parent=67 // pred_check
          %p448 = pneg %p195
        $region74: #{tpu_custom_call.1} parent=67 // pred_check_branch
          %450 = sbr.rel (%p448) target = $region76
        $region75: #{tpu_custom_call.1} parent=67 // pred_region
          %451 = dma.done [#allocation7], 16
        $region76: #{tpu_custom_call.1} parent=67 // pred_fallthru
          _
        // Predicated region
        $region77: #{tpu_custom_call.1} parent=67 // pred_check
          %p452 = pneg %p216
        $region78: #{tpu_custom_call.1} parent=67 // pred_check_branch
          %454 = sbr.rel (%p452) target = $region80
        $region79: #{tpu_custom_call.1} parent=67 // pred_region
          %455 = dma.done [#allocation7], 16
        $region80: #{tpu_custom_call.1} parent=67 // pred_fallthru
          _
        // Predicated region
        $region81: #{tpu_custom_call.1} parent=67 // pred_check
          %p456 = pneg %p237
        $region82: #{tpu_custom_call.1} parent=67 // pred_check_branch
          %458 = sbr.rel (%p456) target = $region84
        $region83: #{tpu_custom_call.1} parent=67 // pred_region
          %459 = dma.done [#allocation10], 256
        $region84: #{tpu_custom_call.1} parent=67 // pred_fallthru
          _
        // Predicated region
        $region85: #{tpu_custom_call.1} parent=67 // pred_check
          %p460 = pneg %p258
        $region86: #{tpu_custom_call.1} parent=67 // pred_check_branch
          %462 = sbr.rel (%p460) target = $region88
        $region87: #{tpu_custom_call.1} parent=67 // pred_region
          %463 = dma.done [#allocation10], 16
        $region88: #{tpu_custom_call.1} parent=67 // pred_fallthru
          _
        %p464 = scmp.lt.s32.totalorder %s35, 1
        %s465 = scalar_select %p464, %s35, 1
        %s466 = smul.addr %s465, 8
        %s467 = scalar_lea.vmem %s0, %s466
        %p468 = pneg %p64
        %p469 = pneg %p61
        %s470 = sand.u32 %s77, 1
        %s471 = scalar_lea.sflag [#allocation4], %s470
        %s472 = sand.u32 %s77, 1
        %s473 = scalar_lea.vmem [#allocation3], %s472
        %p474 = pneg %p90
        %p475 = pneg %p87
        %p476 = pneg %p111
        %p477 = pneg %p108
        %p478 = pneg %p132
        %p479 = pneg %p129
        %p480 = pneg %p153
        %p481 = pneg %p150
        %p482 = pneg %p174
        %p483 = pneg %p171
        %p484 = pneg %p195
        %p485 = pneg %p192
        %p486 = pneg %p216
        %p487 = pneg %p213
        %p488 = pneg %p237
        %p489 = pneg %p234
        %p490 = pneg %p258
        %p491 = pneg %p255
        %p492 = pneg %p279
        %p493 = pneg %p276
        %p494 = pneg %p300
        %p495 = pneg %p297
        %p496 = pneg %p326
        %p497 = pneg %p323
        %s498 = sand.u32 %s313, 1
        %s499 = scalar_lea.sflag [#allocation5], %s498
        %s500 = sand.u32 %s313, 1
        %s501 = smul.addr %s500, 8
        %s502 = scalar_lea.vmem [#allocation12], %s501
        %p503 = scmp.lt.s32.totalorder %s35, 1
        %s504 = scalar_select %p503, %s35, 1
        %s505 = smul.addr %s504, 8
        %s506 = scalar_lea.vmem %s0, %s505
        %p508 = scmp.eq.s32.totalorder %s36, 0
        // Predicated region
        $region89: #{tpu_custom_call.1} parent=67 // pred_check
          %p509 = pneg %p508
        $region90: #{tpu_custom_call.1} parent=67 // pred_check_branch
          %511 = sbr.rel (%p509) target = $region92
        $region91: #{tpu_custom_call.1} parent=67 // pred_region
          %v512 = vld [vmem:[%s506] sm:$0xff]
          %vm513 = vcmask 261120
          %514 = vst.msk [vmem:[#allocation2] sm:$0xff] %vm513, %v512
        $region92: #{tpu_custom_call.1} parent=67 // pred_fallthru
          _
        %v515 = vld [vmem:[#allocation2] sm:$0xff]
        %v516 = vld [vmem:[%s443] sm:$0x1]
        %v517 = vsub.f32 1.0, %v516
        %v518 = vmul.f32 %v517, -1e+09
        %v519 = vld [vmem:[#allocation6] sm:$0x1]
        %v520 = vld [vmem:[#allocation8] sm:$0x1]
        %v521 = vpack.c.bf16 %v515, %v515
        %v522 = vld [vmem:[%s2] sm:$0xf]
        %v523 = vld [vmem:[%s2 + $0x4] sm:$0xf]
        %v524 = vld [vmem:[%s2 + $0x8] sm:$0xf]
        %v525 = vld [vmem:[%s2 + $0xc] sm:$0xf]
        %v526 = vld [vmem:[%s3] sm:$0x1]
        %v528 = vlaneseq
        %v529 = vshrl.u32 %v528, 7
        %v530 = vsub.s32 0, %v529
        %v531 = vrot.slane %v526, %v530
        %v537 = vunpack.c.l.b16 %v522
        %v538 = vunpack.c.l.b16 %v523
        %v539 = vunpack.c.l.b16 %v524
        %v540 = vunpack.c.l.b16 %v525
        %v541 = vpack.c.b16 %v538, %v537
        %v542 = vpack.c.b16 %v540, %v539
        %vm545 = vcmask 261120
        %v547 = vsel %vm545, %v521, 0
        %549 = vmatprep.subr.bf16.mxu0 0
        %550 = vmatpush1.bf16.msra.mxu0 0
        %551 = vmatprep.subr.bf16.mxu0 0
        %552 = vmatpush1.bf16.msra.mxu0 0
        %553 = vmatprep.subr.bf16.mxu0 0
        %554 = vmatpush1.bf16.msra.mxu0 0
        %555 = vmatprep.subr.bf16.mxu0 0
        %556 = vmatpush1.bf16.msra.mxu0 0
        %557 = vmatprep.subr.bf16.mxu0 0
        %558 = vmatpush1.bf16.msra.mxu0 0
        %559 = vmatprep.subr.bf16.mxu0 0
        %560 = vmatpush1.bf16.msra.mxu0 0
        %561 = vmatprep.subr.bf16.mxu0 0
        %562 = vmatpush1.bf16.msra.mxu0 %v542
        %563 = vmatprep.subr.bf16.mxu0 0
        %564 = vmatpush1.bf16.msra.mxu0 %v541
        %565 = vmatprep.subr.bf16.mxu0 0
        %566 = vmatpush2.bf16.msra.mxu0 0
        %567 = vmatprep.subr.bf16.mxu0 0
        %568 = vmatpush2.bf16.msra.mxu0 0
        %569 = vmatprep.subr.bf16.mxu0 0
        %570 = vmatpush2.bf16.msra.mxu0 0
        %571 = vmatprep.subr.bf16.mxu0 0
        %572 = vmatpush2.bf16.msra.mxu0 0
        %573 = vmatprep.subr.bf16.mxu0 0
        %574 = vmatpush2.bf16.msra.mxu0 0
        %575 = vmatprep.subr.bf16.mxu0 0
        %576 = vmatpush2.bf16.msra.mxu0 0
        %577 = vmatprep.subr.bf16.mxu0 0
        %578 = vmatpush2.bf16.msra.mxu0 0
        %579 = vmatprep.subr.bf16.mxu0 0
        %580 = vmatpush2.bf16.msra.mxu0 0
        %581 = vmatprep.mubr.bf16.mxu0 0
        %582 = vmatmul.mubr.bf16.gmra.mxu0 %v547
        %v583 = vpop.f32.mrf.mxu0
        %v584 = vadd.f32 %v531, %v583
        %v585 = vpop.f32.mrf.mxu0
        %v586 = vpop.f32.mrf.mxu0
        %v587 = vpop.f32.mrf.mxu0
        %588 = vdwg.mxu0
        %v589 = vmul.f32 %v584, 0.35355338
        %591 = vrot.lane.b32.xlu0 %v589, 120
        %v592 = vpop.permute.xlu0 %591
        %594 = vrot.lane.b32.xlu0 %v589, 112
        %v595 = vpop.permute.xlu0 %594
        %597 = vrot.lane.b32.xlu0 %v589, 104
        %v598 = vpop.permute.xlu0 %597
        %v600 = vpack.c.bf16 %v589, %v589
        %v601 = vpack.c.bf16 %v592, %v592
        %v602 = vpack.c.bf16 %v595, %v595
        %v603 = vpack.c.bf16 %v598, %v598
        %605 = vrot.lane.b32.xlu0 %v584, 120
        %v606 = vpop.permute.xlu0 %605
        %608 = vrot.lane.b32.xlu0 %v584, 112
        %v609 = vpop.permute.xlu0 %608
        %611 = vrot.lane.b32.xlu0 %v584, 104
        %v612 = vpop.permute.xlu0 %611
        %v614 = vpack.c.bf16 %v584, %v584
        %v615 = vpack.c.bf16 %v606, %v606
        %v616 = vpack.c.bf16 %v609, %v609
        %v617 = vpack.c.bf16 %v612, %v612
        %v619 = vlaneseq
        %v620 = vshrl.u32 %v619, 7
        %v621 = vsub.s32 0, %v620
        %v622 = vrot.slane %v518, %v621
        %625 = vrot.lane.b32.xlu0 %v614, 96
        %v626 = vpop.permute.xlu0 %625
        %vm627 = vcmask 64512
        %v629 = vsel %vm627, %v600, 0
        %v632 = vsel %vm627, %v626, 0
        %634 = vmatprep.subr.bf16.mxu0 0
        %635 = vmatpush1.bf16.xpose.msra.mxu0 0
        %636 = vmatprep.subr.bf16.mxu0 0
        %637 = vmatpush1.bf16.xpose.msra.mxu0 0
        %638 = vmatprep.subr.bf16.mxu0 0
        %639 = vmatpush1.bf16.xpose.msra.mxu0 0
        %640 = vmatprep.subr.bf16.mxu0 0
        %641 = vmatpush1.bf16.xpose.msra.mxu0 0
        %642 = vmatprep.subr.bf16.mxu0 0
        %643 = vmatpush1.bf16.xpose.msra.mxu0 0
        %644 = vmatprep.subr.bf16.mxu0 0
        %645 = vmatpush1.bf16.xpose.msra.mxu0 0
        %646 = vmatprep.subr.bf16.mxu0 0
        %647 = vmatpush1.bf16.xpose.msra.mxu0 0
        %648 = vmatprep.subr.bf16.mxu0 0
        %649 = vmatpush1.bf16.xpose.msra.mxu0 %v632
        %650 = vmatprep.subr.bf16.mxu0 0
        %651 = vmatpush2.bf16.xpose.msra.mxu0 0
        %652 = vmatprep.subr.bf16.mxu0 0
        %653 = vmatpush2.bf16.xpose.msra.mxu0 0
        %654 = vmatprep.subr.bf16.mxu0 0
        %655 = vmatpush2.bf16.xpose.msra.mxu0 0
        %656 = vmatprep.subr.bf16.mxu0 0
        %657 = vmatpush2.bf16.xpose.msra.mxu0 0
        %658 = vmatprep.subr.bf16.mxu0 0
        %659 = vmatpush2.bf16.xpose.msra.mxu0 0
        %660 = vmatprep.subr.bf16.mxu0 0
        %661 = vmatpush2.bf16.xpose.msra.mxu0 0
        %662 = vmatprep.subr.bf16.mxu0 0
        %663 = vmatpush2.bf16.xpose.msra.mxu0 0
        %664 = vmatprep.subr.bf16.mxu0 0
        %665 = vmatpush2.bf16.xpose.msra.mxu0 0
        %666 = vmatprep.mubr.bf16.mxu0 0
        %667 = vmatmul.mubr.bf16.gmra.mxu0 %v629
        %v668 = vpop.f32.mrf.mxu0
        %v669 = vadd.f32 %v622, %v668
        %v670 = vpop.f32.mrf.mxu0
        %v671 = vpop.f32.mrf.mxu0
        %v672 = vpop.f32.mrf.mxu0
        %673 = vdwg.mxu0
        %675 = vrot.lane.b32.xlu0 %v615, 96
        %v676 = vpop.permute.xlu0 %675
        %v678 = vsel %vm627, %v601, 0
        %v681 = vsel %vm627, %v676, 0
        %683 = vmatprep.subr.bf16.mxu0 0
        %684 = vmatpush1.bf16.xpose.msra.mxu0 0
        %685 = vmatprep.subr.bf16.mxu0 0
        %686 = vmatpush1.bf16.xpose.msra.mxu0 0
        %687 = vmatprep.subr.bf16.mxu0 0
        %688 = vmatpush1.bf16.xpose.msra.mxu0 0
        %689 = vmatprep.subr.bf16.mxu0 0
        %690 = vmatpush1.bf16.xpose.msra.mxu0 0
        %691 = vmatprep.subr.bf16.mxu0 0
        %692 = vmatpush1.bf16.xpose.msra.mxu0 0
        %693 = vmatprep.subr.bf16.mxu0 0
        %694 = vmatpush1.bf16.xpose.msra.mxu0 0
        %695 = vmatprep.subr.bf16.mxu0 0
        %696 = vmatpush1.bf16.xpose.msra.mxu0 0
        %697 = vmatprep.subr.bf16.mxu0 0
        %698 = vmatpush1.bf16.xpose.msra.mxu0 %v681
        %699 = vmatprep.subr.bf16.mxu0 0
        %700 = vmatpush2.bf16.xpose.msra.mxu0 0
        %701 = vmatprep.subr.bf16.mxu0 0
        %702 = vmatpush2.bf16.xpose.msra.mxu0 0
        %703 = vmatprep.subr.bf16.mxu0 0
        %704 = vmatpush2.bf16.xpose.msra.mxu0 0
        %705 = vmatprep.subr.bf16.mxu0 0
        %706 = vmatpush2.bf16.xpose.msra.mxu0 0
        %707 = vmatprep.subr.bf16.mxu0 0
        %708 = vmatpush2.bf16.xpose.msra.mxu0 0
        %709 = vmatprep.subr.bf16.mxu0 0
        %710 = vmatpush2.bf16.xpose.msra.mxu0 0
        %711 = vmatprep.subr.bf16.mxu0 0
        %712 = vmatpush2.bf16.xpose.msra.mxu0 0
        %713 = vmatprep.subr.bf16.mxu0 0
        %714 = vmatpush2.bf16.xpose.msra.mxu0 0
        %715 = vmatprep.mubr.bf16.mxu0 0
        %716 = vmatmul.mubr.bf16.gmra.mxu0 %v678
        %v717 = vpop.f32.mrf.mxu0
        %v718 = vadd.f32 %v622, %v717
        %v719 = vpop.f32.mrf.mxu0
        %v720 = vpop.f32.mrf.mxu0
        %v721 = vpop.f32.mrf.mxu0
        %722 = vdwg.mxu0
        %724 = vrot.lane.b32.xlu0 %v616, 96
        %v725 = vpop.permute.xlu0 %724
        %v727 = vsel %vm627, %v602, 0
        %v730 = vsel %vm627, %v725, 0
        %732 = vmatprep.subr.bf16.mxu0 0
        %733 = vmatpush1.bf16.xpose.msra.mxu0 0
        %734 = vmatprep.subr.bf16.mxu0 0
        %735 = vmatpush1.bf16.xpose.msra.mxu0 0
        %736 = vmatprep.subr.bf16.mxu0 0
        %737 = vmatpush1.bf16.xpose.msra.mxu0 0
        %738 = vmatprep.subr.bf16.mxu0 0
        %739 = vmatpush1.bf16.xpose.msra.mxu0 0
        %740 = vmatprep.subr.bf16.mxu0 0
        %741 = vmatpush1.bf16.xpose.msra.mxu0 0
        %742 = vmatprep.subr.bf16.mxu0 0
        %743 = vmatpush1.bf16.xpose.msra.mxu0 0
        %744 = vmatprep.subr.bf16.mxu0 0
        %745 = vmatpush1.bf16.xpose.msra.mxu0 0
        %746 = vmatprep.subr.bf16.mxu0 0
        %747 = vmatpush1.bf16.xpose.msra.mxu0 %v730
        %748 = vmatprep.subr.bf16.mxu0 0
        %749 = vmatpush2.bf16.xpose.msra.mxu0 0
        %750 = vmatprep.subr.bf16.mxu0 0
        %751 = vmatpush2.bf16.xpose.msra.mxu0 0
        %752 = vmatprep.subr.bf16.mxu0 0
        %753 = vmatpush2.bf16.xpose.msra.mxu0 0
        %754 = vmatprep.subr.bf16.mxu0 0
        %755 = vmatpush2.bf16.xpose.msra.mxu0 0
        %756 = vmatprep.subr.bf16.mxu0 0
        %757 = vmatpush2.bf16.xpose.msra.mxu0 0
        %758 = vmatprep.subr.bf16.mxu0 0
        %759 = vmatpush2.bf16.xpose.msra.mxu0 0
        %760 = vmatprep.subr.bf16.mxu0 0
        %761 = vmatpush2.bf16.xpose.msra.mxu0 0
        %762 = vmatprep.subr.bf16.mxu0 0
        %763 = vmatpush2.bf16.xpose.msra.mxu0 0
        %764 = vmatprep.mubr.bf16.mxu0 0
        %765 = vmatmul.mubr.bf16.gmra.mxu0 %v727
        %v766 = vpop.f32.mrf.mxu0
        %v767 = vadd.f32 %v622, %v766
        %v768 = vpop.f32.mrf.mxu0
        %v769 = vpop.f32.mrf.mxu0
        %v770 = vpop.f32.mrf.mxu0
        %771 = vdwg.mxu0
        %773 = vrot.lane.b32.xlu0 %v617, 96
        %v774 = vpop.permute.xlu0 %773
        %v776 = vsel %vm627, %v603, 0
        %v779 = vsel %vm627, %v774, 0
        %781 = vmatprep.subr.bf16.mxu0 0
        %782 = vmatpush1.bf16.xpose.msra.mxu0 0
        %783 = vmatprep.subr.bf16.mxu0 0
        %784 = vmatpush1.bf16.xpose.msra.mxu0 0
        %785 = vmatprep.subr.bf16.mxu0 0
        %786 = vmatpush1.bf16.xpose.msra.mxu0 0
        %787 = vmatprep.subr.bf16.mxu0 0
        %788 = vmatpush1.bf16.xpose.msra.mxu0 0
        %789 = vmatprep.subr.bf16.mxu0 0
        %790 = vmatpush1.bf16.xpose.msra.mxu0 0
        %791 = vmatprep.subr.bf16.mxu0 0
        %792 = vmatpush1.bf16.xpose.msra.mxu0 0
        %793 = vmatprep.subr.bf16.mxu0 0
        %794 = vmatpush1.bf16.xpose.msra.mxu0 0
        %795 = vmatprep.subr.bf16.mxu0 0
        %796 = vmatpush1.bf16.xpose.msra.mxu0 %v779
        %797 = vmatprep.subr.bf16.mxu0 0
        %798 = vmatpush2.bf16.xpose.msra.mxu0 0
        %799 = vmatprep.subr.bf16.mxu0 0
        %800 = vmatpush2.bf16.xpose.msra.mxu0 0
        %801 = vmatprep.subr.bf16.mxu0 0
        %802 = vmatpush2.bf16.xpose.msra.mxu0 0
        %803 = vmatprep.subr.bf16.mxu0 0
        %804 = vmatpush2.bf16.xpose.msra.mxu0 0
        %805 = vmatprep.subr.bf16.mxu0 0
        %806 = vmatpush2.bf16.xpose.msra.mxu0 0
        %807 = vmatprep.subr.bf16.mxu0 0
        %808 = vmatpush2.bf16.xpose.msra.mxu0 0
        %809 = vmatprep.subr.bf16.mxu0 0
        %810 = vmatpush2.bf16.xpose.msra.mxu0 0
        %811 = vmatprep.subr.bf16.mxu0 0
        %812 = vmatpush2.bf16.xpose.msra.mxu0 0
        %813 = vmatprep.mubr.bf16.mxu0 0
        %814 = vmatmul.mubr.bf16.gmra.mxu0 %v776
        %v815 = vpop.f32.mrf.mxu0
        %v816 = vadd.f32 %v622, %v815
        %v817 = vpop.f32.mrf.mxu0
        %v818 = vpop.f32.mrf.mxu0
        %v819 = vpop.f32.mrf.mxu0
        %820 = vdwg.mxu0
        %v821 = vsel %vm627, %v669, -inf
        %822 = vmax.xlane.f32.xlu0 %v821
        %v823 = vpop.xlane.xlu0 %822
        %v824 = vsel %vm627, %v718, -inf
        %825 = vmax.xlane.f32.xlu0 %v824
        %v826 = vpop.xlane.xlu0 %825
        %v827 = vsel %vm627, %v767, -inf
        %828 = vmax.xlane.f32.xlu0 %v827
        %v829 = vpop.xlane.xlu0 %828
        %v830 = vsel %vm627, %v816, -inf
        %831 = vmax.xlane.f32.xlu0 %v830
        %v832 = vpop.xlane.xlu0 %831
        %v833 = vsub.f32 %v669, %v823
        %v834 = vsub.f32 %v718, %v826
        %v835 = vsub.f32 %v767, %v829
        %v836 = vsub.f32 %v816, %v832
        %v837 = vmul.f32 %v833, 1.442695
        %v838 = vpow.pop %v837
        %v839 = vmul.f32 %v834, 1.442695
        %v840 = vpow.pop %v839
        %v841 = vmul.f32 %v835, 1.442695
        %v842 = vpow.pop %v841
        %v843 = vmul.f32 %v836, 1.442695
        %v844 = vpow.pop %v843
        %v845 = vsel %vm627, %v838, 0.0
        %846 = vadd.xlane.f32.xlu0 %v845
        %v847 = vpop.xlane.xlu0 %846
        %v848 = vsel %vm627, %v840, 0.0
        %849 = vadd.xlane.f32.xlu0 %v848
        %v850 = vpop.xlane.xlu0 %849
        %v851 = vsel %vm627, %v842, 0.0
        %852 = vadd.xlane.f32.xlu0 %v851
        %v853 = vpop.xlane.xlu0 %852
        %v854 = vsel %vm627, %v844, 0.0
        %855 = vadd.xlane.f32.xlu0 %v854
        %v856 = vpop.xlane.xlu0 %855
        %v857 = vrcp.pop %v847
        %v858 = vrcp.pop %v850
        %v859 = vrcp.pop %v853
        %v860 = vrcp.pop %v856
        %v861 = vmul.f32 %v838, %v857
        %v862 = vmul.f32 %v840, %v858
        %v863 = vmul.f32 %v842, %v859
        %v864 = vmul.f32 %v844, %v860
        %v865 = vpack.c.bf16 %v861, %v861
        %v866 = vpack.c.bf16 %v862, %v862
        %v867 = vpack.c.bf16 %v863, %v863
        %v868 = vpack.c.bf16 %v864, %v864
        %869 = vrot.lane.b32.xlu0 %v614, 64
        %v870 = vpop.permute.xlu0 %869
        %v872 = vsel %vm627, %v865, 0
        %vm874 = vcmask 1043456
        %v876 = vsel %vm874, %v870, 0
        %878 = vmatprep.subr.bf16.mxu0 0
        %879 = vmatpush1.bf16.msra.mxu0 0
        %880 = vmatprep.subr.bf16.mxu0 0
        %881 = vmatpush1.bf16.msra.mxu0 0
        %882 = vmatprep.subr.bf16.mxu0 0
        %883 = vmatpush1.bf16.msra.mxu0 0
        %884 = vmatprep.subr.bf16.mxu0 0
        %885 = vmatpush1.bf16.msra.mxu0 0
        %886 = vmatprep.subr.bf16.mxu0 0
        %887 = vmatpush1.bf16.msra.mxu0 0
        %888 = vmatprep.subr.bf16.mxu0 0
        %889 = vmatpush1.bf16.msra.mxu0 0
        %890 = vmatprep.subr.bf16.mxu0 0
        %891 = vmatpush1.bf16.msra.mxu0 0
        %892 = vmatprep.subr.bf16.mxu0 0
        %893 = vmatpush1.bf16.msra.mxu0 %v876
        %894 = vmatprep.subr.bf16.mxu0 0
        %895 = vmatpush2.bf16.msra.mxu0 0
        %896 = vmatprep.subr.bf16.mxu0 0
        %897 = vmatpush2.bf16.msra.mxu0 0
        %898 = vmatprep.subr.bf16.mxu0 0
        %899 = vmatpush2.bf16.msra.mxu0 0
        %900 = vmatprep.subr.bf16.mxu0 0
        %901 = vmatpush2.bf16.msra.mxu0 0
        %902 = vmatprep.subr.bf16.mxu0 0
        %903 = vmatpush2.bf16.msra.mxu0 0
        %904 = vmatprep.subr.bf16.mxu0 0
        %905 = vmatpush2.bf16.msra.mxu0 0
        %906 = vmatprep.subr.bf16.mxu0 0
        %907 = vmatpush2.bf16.msra.mxu0 0
        %908 = vmatprep.subr.bf16.mxu0 0
        %909 = vmatpush2.bf16.msra.mxu0 0
        %910 = vmatprep.mubr.bf16.mxu0 0
        %911 = vmatmul.mubr.bf16.gmra.mxu0 %v872
        %v912 = vpop.f32.mrf.mxu0
        %v913 = vadd.f32 0.0, %v912
        %v914 = vpop.f32.mrf.mxu0
        %v915 = vpop.f32.mrf.mxu0
        %v916 = vpop.f32.mrf.mxu0
        %917 = vdwg.mxu0
        %918 = vrot.lane.b32.xlu0 %v615, 64
        %v919 = vpop.permute.xlu0 %918
        %v921 = vsel %vm627, %v866, 0
        %v924 = vsel %vm874, %v919, 0
        %926 = vmatprep.subr.bf16.mxu0 0
        %927 = vmatpush1.bf16.msra.mxu0 0
        %928 = vmatprep.subr.bf16.mxu0 0
        %929 = vmatpush1.bf16.msra.mxu0 0
        %930 = vmatprep.subr.bf16.mxu0 0
        %931 = vmatpush1.bf16.msra.mxu0 0
        %932 = vmatprep.subr.bf16.mxu0 0
        %933 = vmatpush1.bf16.msra.mxu0 0
        %934 = vmatprep.subr.bf16.mxu0 0
        %935 = vmatpush1.bf16.msra.mxu0 0
        %936 = vmatprep.subr.bf16.mxu0 0
        %937 = vmatpush1.bf16.msra.mxu0 0
        %938 = vmatprep.subr.bf16.mxu0 0
        %939 = vmatpush1.bf16.msra.mxu0 0
        %940 = vmatprep.subr.bf16.mxu0 0
        %941 = vmatpush1.bf16.msra.mxu0 %v924
        %942 = vmatprep.subr.bf16.mxu0 0
        %943 = vmatpush2.bf16.msra.mxu0 0
        %944 = vmatprep.subr.bf16.mxu0 0
        %945 = vmatpush2.bf16.msra.mxu0 0
        %946 = vmatprep.subr.bf16.mxu0 0
        %947 = vmatpush2.bf16.msra.mxu0 0
        %948 = vmatprep.subr.bf16.mxu0 0
        %949 = vmatpush2.bf16.msra.mxu0 0
        %950 = vmatprep.subr.bf16.mxu0 0
        %951 = vmatpush2.bf16.msra.mxu0 0
        %952 = vmatprep.subr.bf16.mxu0 0
        %953 = vmatpush2.bf16.msra.mxu0 0
        %954 = vmatprep.subr.bf16.mxu0 0
        %955 = vmatpush2.bf16.msra.mxu0 0
        %956 = vmatprep.subr.bf16.mxu0 0
        %957 = vmatpush2.bf16.msra.mxu0 0
        %958 = vmatprep.mubr.bf16.mxu0 0
        %959 = vmatmul.mubr.bf16.gmra.mxu0 %v921
        %v960 = vpop.f32.mrf.mxu0
        %v961 = vadd.f32 0.0, %v960
        %v962 = vpop.f32.mrf.mxu0
        %v963 = vpop.f32.mrf.mxu0
        %v964 = vpop.f32.mrf.mxu0
        %965 = vdwg.mxu0
        %966 = vrot.lane.b32.xlu0 %v616, 64
        %v967 = vpop.permute.xlu0 %966
        %v969 = vsel %vm627, %v867, 0
        %v972 = vsel %vm874, %v967, 0
        %974 = vmatprep.subr.bf16.mxu0 0
        %975 = vmatpush1.bf16.msra.mxu0 0
        %976 = vmatprep.subr.bf16.mxu0 0
        %977 = vmatpush1.bf16.msra.mxu0 0
        %978 = vmatprep.subr.bf16.mxu0 0
        %979 = vmatpush1.bf16.msra.mxu0 0
        %980 = vmatprep.subr.bf16.mxu0 0
        %981 = vmatpush1.bf16.msra.mxu0 0
        %982 = vmatprep.subr.bf16.mxu0 0
        %983 = vmatpush1.bf16.msra.mxu0 0
        %984 = vmatprep.subr.bf16.mxu0 0
        %985 = vmatpush1.bf16.msra.mxu0 0
        %986 = vmatprep.subr.bf16.mxu0 0
        %987 = vmatpush1.bf16.msra.mxu0 0
        %988 = vmatprep.subr.bf16.mxu0 0
        %989 = vmatpush1.bf16.msra.mxu0 %v972
        %990 = vmatprep.subr.bf16.mxu0 0
        %991 = vmatpush2.bf16.msra.mxu0 0
        %992 = vmatprep.subr.bf16.mxu0 0
        %993 = vmatpush2.bf16.msra.mxu0 0
        %994 = vmatprep.subr.bf16.mxu0 0
        %995 = vmatpush2.bf16.msra.mxu0 0
        %996 = vmatprep.subr.bf16.mxu0 0
        %997 = vmatpush2.bf16.msra.mxu0 0
        %998 = vmatprep.subr.bf16.mxu0 0
        %999 = vmatpush2.bf16.msra.mxu0 0
        %1000 = vmatprep.subr.bf16.mxu0 0
        %1001 = vmatpush2.bf16.msra.mxu0 0
        %1002 = vmatprep.subr.bf16.mxu0 0
        %1003 = vmatpush2.bf16.msra.mxu0 0
        %1004 = vmatprep.subr.bf16.mxu0 0
        %1005 = vmatpush2.bf16.msra.mxu0 0
        %1006 = vmatprep.mubr.bf16.mxu0 0
        %1007 = vmatmul.mubr.bf16.gmra.mxu0 %v969
        %v1008 = vpop.f32.mrf.mxu0
        %v1009 = vadd.f32 0.0, %v1008
        %v1010 = vpop.f32.mrf.mxu0
        %v1011 = vpop.f32.mrf.mxu0
        %v1012 = vpop.f32.mrf.mxu0
        %1013 = vdwg.mxu0
        %1014 = vrot.lane.b32.xlu0 %v617, 64
        %v1015 = vpop.permute.xlu0 %1014
        %v1017 = vsel %vm627, %v868, 0
        %v1020 = vsel %vm874, %v1015, 0
        %1022 = vmatprep.subr.bf16.mxu0 0
        %1023 = vmatpush1.bf16.msra.mxu0 0
        %1024 = vmatprep.subr.bf16.mxu0 0
        %1025 = vmatpush1.bf16.msra.mxu0 0
        %1026 = vmatprep.subr.bf16.mxu0 0
        %1027 = vmatpush1.bf16.msra.mxu0 0
        %1028 = vmatprep.subr.bf16.mxu0 0
        %1029 = vmatpush1.bf16.msra.mxu0 0
        %1030 = vmatprep.subr.bf16.mxu0 0
        %1031 = vmatpush1.bf16.msra.mxu0 0
        %1032 = vmatprep.subr.bf16.mxu0 0
        %1033 = vmatpush1.bf16.msra.mxu0 0
        %1034 = vmatprep.subr.bf16.mxu0 0
        %1035 = vmatpush1.bf16.msra.mxu0 0
        %1036 = vmatprep.subr.bf16.mxu0 0
        %1037 = vmatpush1.bf16.msra.mxu0 %v1020
        %1038 = vmatprep.subr.bf16.mxu0 0
        %1039 = vmatpush2.bf16.msra.mxu0 0
        %1040 = vmatprep.subr.bf16.mxu0 0
        %1041 = vmatpush2.bf16.msra.mxu0 0
        %1042 = vmatprep.subr.bf16.mxu0 0
        %1043 = vmatpush2.bf16.msra.mxu0 0
        %1044 = vmatprep.subr.bf16.mxu0 0
        %1045 = vmatpush2.bf16.msra.mxu0 0
        %1046 = vmatprep.subr.bf16.mxu0 0
        %1047 = vmatpush2.bf16.msra.mxu0 0
        %1048 = vmatprep.subr.bf16.mxu0 0
        %1049 = vmatpush2.bf16.msra.mxu0 0
        %1050 = vmatprep.subr.bf16.mxu0 0
        %1051 = vmatpush2.bf16.msra.mxu0 0
        %1052 = vmatprep.subr.bf16.mxu0 0
        %1053 = vmatpush2.bf16.msra.mxu0 0
        %1054 = vmatprep.mubr.bf16.mxu0 0
        %1055 = vmatmul.mubr.bf16.gmra.mxu0 %v1017
        %v1056 = vpop.f32.mrf.mxu0
        %v1057 = vadd.f32 0.0, %v1056
        %v1058 = vpop.f32.mrf.mxu0
        %v1059 = vpop.f32.mrf.mxu0
        %v1060 = vpop.f32.mrf.mxu0
        %1061 = vdwg.mxu0
        %1063 = vrot.lane.b32.xlu0 %v961, 8
        %v1064 = vpop.permute.xlu0 %1063
        %1067 = vrot.lane.b32.xlu0 %v1009, 16
        %v1068 = vpop.permute.xlu0 %1067
        %1071 = vrot.lane.b32.xlu0 %v1057, 24
        %v1072 = vpop.permute.xlu0 %1071
        %v1074 = vsel %vm627, %v913, %v1064
        %vm1075 = vcmask 130048
        %v1076 = vsel %vm1075, %v1074, %v1068
        %vm1077 = vcmask 195584
        %v1078 = vsel %vm1077, %v1076, %v1072
        %v1079 = vpack.c.bf16 %v1078, %v1078
        %v1080 = vld [vmem:[%s4] sm:$0xf]
        %v1081 = vld [vmem:[%s4 + $0x4] sm:$0xf]
        %v1082 = vld [vmem:[%s4 + $0x8] sm:$0xf]
        %v1083 = vld [vmem:[%s4 + $0xc] sm:$0xf]
        %v1084 = vld [vmem:[%s5] sm:$0x1]
        %v1086 = vlaneseq
        %v1087 = vshrl.u32 %v1086, 7
        %v1088 = vsub.s32 0, %v1087
        %v1089 = vrot.slane %v1084, %v1088
        %v1095 = vunpack.c.l.b16 %v1080
        %v1096 = vunpack.c.l.b16 %v1081
        %v1097 = vunpack.c.l.b16 %v1082
        %v1098 = vunpack.c.l.b16 %v1083
        %v1099 = vpack.c.b16 %v1096, %v1095
        %v1100 = vpack.c.b16 %v1098, %v1097
        %v1104 = vsel %vm545, %v1079, 0
        %1106 = vmatprep.subr.bf16.mxu0 0
        %1107 = vmatpush1.bf16.msra.mxu0 0
        %1108 = vmatprep.subr.bf16.mxu0 0
        %1109 = vmatpush1.bf16.msra.mxu0 0
        %1110 = vmatprep.subr.bf16.mxu0 0
        %1111 = vmatpush1.bf16.msra.mxu0 0
        %1112 = vmatprep.subr.bf16.mxu0 0
        %1113 = vmatpush1.bf16.msra.mxu0 0
        %1114 = vmatprep.subr.bf16.mxu0 0
        %1115 = vmatpush1.bf16.msra.mxu0 0
        %1116 = vmatprep.subr.bf16.mxu0 0
        %1117 = vmatpush1.bf16.msra.mxu0 0
        %1118 = vmatprep.subr.bf16.mxu0 0
        %1119 = vmatpush1.bf16.msra.mxu0 %v1100
        %1120 = vmatprep.subr.bf16.mxu0 0
        %1121 = vmatpush1.bf16.msra.mxu0 %v1099
        %1122 = vmatprep.subr.bf16.mxu0 0
        %1123 = vmatpush2.bf16.msra.mxu0 0
        %1124 = vmatprep.subr.bf16.mxu0 0
        %1125 = vmatpush2.bf16.msra.mxu0 0
        %1126 = vmatprep.subr.bf16.mxu0 0
        %1127 = vmatpush2.bf16.msra.mxu0 0
        %1128 = vmatprep.subr.bf16.mxu0 0
        %1129 = vmatpush2.bf16.msra.mxu0 0
        %1130 = vmatprep.subr.bf16.mxu0 0
        %1131 = vmatpush2.bf16.msra.mxu0 0
        %1132 = vmatprep.subr.bf16.mxu0 0
        %1133 = vmatpush2.bf16.msra.mxu0 0
        %1134 = vmatprep.subr.bf16.mxu0 0
        %1135 = vmatpush2.bf16.msra.mxu0 0
        %1136 = vmatprep.subr.bf16.mxu0 0
        %1137 = vmatpush2.bf16.msra.mxu0 0
        %1138 = vmatprep.mubr.bf16.mxu0 0
        %1139 = vmatmul.mubr.bf16.gmra.mxu0 %v1104
        %v1140 = vpop.f32.mrf.mxu0
        %v1141 = vadd.f32 %v1089, %v1140
        %v1142 = vpop.f32.mrf.mxu0
        %v1143 = vpop.f32.mrf.mxu0
        %v1144 = vpop.f32.mrf.mxu0
        %1145 = vdwg.mxu0
        %v1146 = vadd.f32 %v515, %v1141
        %v1147 = vsel %vm545, %v1146, 0.0
        %1148 = vadd.xlane.f32.xlu0 %v1147
        %v1149 = vpop.xlane.xlu0 %1148
        %v1150 = vrcp.pop 32.0
        %v1151 = vmul.f32 %v1149, %v1150
        %v1152 = vsub.f32 %v1146, %v1151
        %v1153 = vmul.f32 %v1152, %v1152
        %v1154 = vsel %vm545, %v1153, 0.0
        %1155 = vadd.xlane.f32.xlu0 %v1154
        %v1156 = vpop.xlane.xlu0 %1155
        %v1157 = vmul.f32 %v1156, %v1150
        %v1158 = vadd.f32 %v1157, 1e-05
        %v1159 = vrsqrt.pop %v1158
        %v1160 = vmul.f32 %v1152, %v1159
        %v1162 = vlaneseq
        %v1163 = vshrl.u32 %v1162, 7
        %v1164 = vsub.s32 0, %v1163
        %v1165 = vrot.slane %v519, %v1164
        %v1167 = vmul.f32 %v1160, %v1165
        %v1169 = vlaneseq
        %v1170 = vshrl.u32 %v1169, 7
        %v1171 = vsub.s32 0, %v1170
        %v1172 = vrot.slane %v520, %v1171
        %v1174 = vadd.f32 %v1167, %v1172
        %v1175 = vpack.c.bf16 %v1174, %v1174
        %v1176 = vld [vmem:[#allocation9] sm:$0xf]
        %v1177 = vld [vmem:[#allocation9 + $0x4] sm:$0xf]
        %v1178 = vld [vmem:[#allocation9 + $0x8] sm:$0xf]
        %v1179 = vld [vmem:[#allocation9 + $0xc] sm:$0xf]
        %v1180 = vld [vmem:[#allocation11] sm:$0x1]
        %v1182 = vlaneseq
        %v1183 = vshrl.u32 %v1182, 7
        %v1184 = vsub.s32 0, %v1183
        %v1185 = vrot.slane %v1180, %v1184
        %v1191 = vunpack.c.l.b16 %v1176
        %v1192 = vunpack.c.l.b16 %v1177
        %v1193 = vunpack.c.l.b16 %v1178
        %v1194 = vunpack.c.l.b16 %v1179
        %v1195 = vpack.c.b16 %v1192, %v1191
        %v1196 = vpack.c.b16 %v1194, %v1193
        %v1200 = vsel %vm545, %v1175, 0
        %1202 = vmatprep.subr.bf16.mxu0 0
        %1203 = vmatpush1.bf16.msra.mxu0 0
        %1204 = vmatprep.subr.bf16.mxu0 0
        %1205 = vmatpush1.bf16.msra.mxu0 0
        %1206 = vmatprep.subr.bf16.mxu0 0
        %1207 = vmatpush1.bf16.msra.mxu0 0
        %1208 = vmatprep.subr.bf16.mxu0 0
        %1209 = vmatpush1.bf16.msra.mxu0 0
        %1210 = vmatprep.subr.bf16.mxu0 0
        %1211 = vmatpush1.bf16.msra.mxu0 0
        %1212 = vmatprep.subr.bf16.mxu0 0
        %1213 = vmatpush1.bf16.msra.mxu0 0
        %1214 = vmatprep.subr.bf16.mxu0 0
        %1215 = vmatpush1.bf16.msra.mxu0 %v1196
        %1216 = vmatprep.subr.bf16.mxu0 0
        %1217 = vmatpush1.bf16.msra.mxu0 %v1195
        %1218 = vmatprep.subr.bf16.mxu0 0
        %1219 = vmatpush2.bf16.msra.mxu0 0
        %1220 = vmatprep.subr.bf16.mxu0 0
        %1221 = vmatpush2.bf16.msra.mxu0 0
        %1222 = vmatprep.subr.bf16.mxu0 0
        %1223 = vmatpush2.bf16.msra.mxu0 0
        %1224 = vmatprep.subr.bf16.mxu0 0
        %1225 = vmatpush2.bf16.msra.mxu0 0
        %1226 = vmatprep.subr.bf16.mxu0 0
        %1227 = vmatpush2.bf16.msra.mxu0 0
        %1228 = vmatprep.subr.bf16.mxu0 0
        %1229 = vmatpush2.bf16.msra.mxu0 0
        %1230 = vmatprep.subr.bf16.mxu0 0
        %1231 = vmatpush2.bf16.msra.mxu0 0
        %1232 = vmatprep.subr.bf16.mxu0 0
        %1233 = vmatpush2.bf16.msra.mxu0 0
        %1234 = vmatprep.mubr.bf16.mxu0 0
        %1235 = vmatmul.mubr.bf16.gmra.mxu0 %v1200
        %v1236 = vpop.f32.mrf.mxu0
        %v1237 = vadd.f32 %v1185, %v1236
        %v1238 = vpop.f32.mrf.mxu0
        %v1239 = vpop.f32.mrf.mxu0
        %v1240 = vpop.f32.mrf.mxu0
        %1241 = vdwg.mxu0
        %v1242 = vmax.f32 %v1237, 0.0
        %v1243 = vpack.c.bf16 %v1242, %v1242
        %v1244 = vld [vmem:[%s10] sm:$0xf]
        %v1245 = vld [vmem:[%s10 + $0x4] sm:$0xf]
        %v1246 = vld [vmem:[%s10 + $0x8] sm:$0xf]
        %v1247 = vld [vmem:[%s10 + $0xc] sm:$0xf]
        %v1248 = vld [vmem:[%s10 + $0x10] sm:$0xf]
        %v1249 = vld [vmem:[%s10 + $0x14] sm:$0xf]
        %v1250 = vld [vmem:[%s10 + $0x18] sm:$0xf]
        %v1251 = vld [vmem:[%s10 + $0x1c] sm:$0xf]
        %v1252 = vld [vmem:[%s11] sm:$0x1]
        %v1254 = vlaneseq
        %v1255 = vshrl.u32 %v1254, 7
        %v1256 = vsub.s32 0, %v1255
        %v1257 = vrot.slane %v1252, %v1256
        %v1267 = vunpack.c.l.b16 %v1244
        %v1268 = vunpack.c.l.b16 %v1245
        %v1269 = vunpack.c.l.b16 %v1246
        %v1270 = vunpack.c.l.b16 %v1247
        %v1271 = vunpack.c.l.b16 %v1248
        %v1272 = vunpack.c.l.b16 %v1249
        %v1273 = vunpack.c.l.b16 %v1250
        %v1274 = vunpack.c.l.b16 %v1251
        %v1275 = vpack.c.b16 %v1268, %v1267
        %v1276 = vpack.c.b16 %v1270, %v1269
        %v1277 = vpack.c.b16 %v1272, %v1271
        %v1278 = vpack.c.b16 %v1274, %v1273
        %vm1283 = vcmask 523264
        %v1285 = vsel %vm1283, %v1243, 0
        %1287 = vmatprep.subr.bf16.mxu0 0
        %1288 = vmatpush1.bf16.msra.mxu0 0
        %1289 = vmatprep.subr.bf16.mxu0 0
        %1290 = vmatpush1.bf16.msra.mxu0 0
        %1291 = vmatprep.subr.bf16.mxu0 0
        %1292 = vmatpush1.bf16.msra.mxu0 0
        %1293 = vmatprep.subr.bf16.mxu0 0
        %1294 = vmatpush1.bf16.msra.mxu0 0
        %1295 = vmatprep.subr.bf16.mxu0 0
        %1296 = vmatpush1.bf16.msra.mxu0 %v1278
        %1297 = vmatprep.subr.bf16.mxu0 0
        %1298 = vmatpush1.bf16.msra.mxu0 %v1277
        %1299 = vmatprep.subr.bf16.mxu0 0
        %1300 = vmatpush1.bf16.msra.mxu0 %v1276
        %1301 = vmatprep.subr.bf16.mxu0 0
        %1302 = vmatpush1.bf16.msra.mxu0 %v1275
        %1303 = vmatprep.subr.bf16.mxu0 0
        %1304 = vmatpush2.bf16.msra.mxu0 0
        %1305 = vmatprep.subr.bf16.mxu0 0
        %1306 = vmatpush2.bf16.msra.mxu0 0
        %1307 = vmatprep.subr.bf16.mxu0 0
        %1308 = vmatpush2.bf16.msra.mxu0 0
        %1309 = vmatprep.subr.bf16.mxu0 0
        %1310 = vmatpush2.bf16.msra.mxu0 0
        %1311 = vmatprep.subr.bf16.mxu0 0
        %1312 = vmatpush2.bf16.msra.mxu0 0
        %1313 = vmatprep.subr.bf16.mxu0 0
        %1314 = vmatpush2.bf16.msra.mxu0 0
        %1315 = vmatprep.subr.bf16.mxu0 0
        %1316 = vmatpush2.bf16.msra.mxu0 0
        %1317 = vmatprep.subr.bf16.mxu0 0
        %1318 = vmatpush2.bf16.msra.mxu0 0
        %1319 = vmatprep.mubr.bf16.mxu0 0
        %1320 = vmatmul.mubr.bf16.gmra.mxu0 %v1285
        %v1321 = vpop.f32.mrf.mxu0
        %v1322 = vadd.f32 %v1257, %v1321
        %v1323 = vpop.f32.mrf.mxu0
        %v1324 = vpop.f32.mrf.mxu0
        %v1325 = vpop.f32.mrf.mxu0
        %1326 = vdwg.mxu0
        %v1327 = vadd.f32 %v1174, %v1322
        %v1328 = vsel %vm545, %v1327, 0.0
        %1329 = vadd.xlane.f32.xlu0 %v1328
        %v1330 = vpop.xlane.xlu0 %1329
        %v1331 = vmul.f32 %v1330, %v1150
        %v1332 = vsub.f32 %v1327, %v1331
        %v1333 = vmul.f32 %v1332, %v1332
        %v1334 = vsel %vm545, %v1333, 0.0
        %1335 = vadd.xlane.f32.xlu0 %v1334
        %v1336 = vpop.xlane.xlu0 %1335
        %v1337 = vmul.f32 %v1336, %v1150
        %v1338 = vadd.f32 %v1337, 1e-05
        %v1339 = vrsqrt.pop %v1338
        %v1340 = vmul.f32 %v1332, %v1339
        %v1341 = vmul.f32 %v1340, %v1165
        %v1342 = vadd.f32 %v1341, %v1172
        %1343 = vst.msk [vmem:[#allocation2] sm:$0xff] %vm545, %v1342
        %p1344 = scmp.eq.s32.totalorder %s36, 1
        // Predicated region
        $region93: #{tpu_custom_call.1} parent=67 // pred_check
          %p1345 = pneg %p1344
        $region94: #{tpu_custom_call.1} parent=67 // pred_check_branch
          %1347 = sbr.rel (%p1345) target = $region96
        $region95: #{tpu_custom_call.1} parent=67 // pred_region
          %1348 = vst.msk [vmem:[%s502] sm:$0xff] %vm545, %v1342
        $region96: #{tpu_custom_call.1} parent=67 // pred_fallthru
          _
        %s1349 = sand.u32 %s313, 1
        %s1350 = scalar_lea.sflag [#allocation5], %s1349
        %s1351 = sand.u32 %s313, 1
        %s1352 = smul.addr %s1351, 8
        %s1353 = scalar_lea.vmem [#allocation12], %s1352
        // Predicated region
        $region97: #{tpu_custom_call.1} parent=67 // pred_check
          %p1354 = pneg %p323
        $region98: #{tpu_custom_call.1} parent=67 // pred_check_branch
          %1356 = sbr.rel (%p1354) target = $region100
        $region99: #{tpu_custom_call.1} parent=67 // pred_region
          %s1358 = ssub.s32 128, 128
          %1359 = vsyncadd %s1350, %s1358
          %s1360 = smul.addr %s35, 128
          %s1361 = scalar_lea.hbm %s12, %s1360
          %s1363 = sshll.u32 %s1353, 4
          %s1364 = int_to_ptr.vmem [resolvable:$true] %s1363
          %1366 = dma.vmem_to_hbm [thread:$0]  %s1364, 128, %s1361, %s1350
        $region100: #{tpu_custom_call.1} parent=67 // pred_fallthru
          _
      $region68: #{tpu_custom_call.1} parent=5 // pred_fallthru
        _
      %p1367 = scmp.le.s32.totalorder 2, %s26
      // Predicated region
      $region101: #{tpu_custom_call.1} parent=5 // pred_check
        %p1368 = pneg %p1367
      $region102: #{tpu_custom_call.1} parent=5 // pred_check_branch
        %1370 = sbr.rel (%p1368) target = $region104
      $region103: #{tpu_custom_call.1} parent=5 // pred_region
        %s1371 = ssub.s32 %s26, 2
        // Predicated region
        $region105: #{tpu_custom_call.1} parent=103 // pred_check
          %p1372 = pneg %p329
        $region106: #{tpu_custom_call.1} parent=103 // pred_check_branch
          %1374 = sbr.rel (%p1372) target = $region108
        $region107: #{tpu_custom_call.1} parent=103 // pred_region
          %s1375 = sand.u32 %s314, 1
          %s1376 = scalar_lea.sflag [#allocation5], %s1375
          %s1377 = sand.u32 %s314, 1
          %s1378 = smul.addr %s1377, 8
          %s1379 = scalar_lea.vmem [#allocation12], %s1378
          %1380 = dma.done %s1376, 128
        $region108: #{tpu_custom_call.1} parent=103 // pred_fallthru
          _
      $region104: #{tpu_custom_call.1} parent=5 // pred_fallthru
        _
    $region6: #{tpu_custom_call.1} parent=1 // loop_footer
      %s30 = sadd.s32 1, %s26
    $region7: #{tpu_custom_call.1} parent=1 // loop_footer_branch
      %25 = sbr.rel target = $region3
    $region8: #{tpu_custom_call.1} parent=1 // loop_exit
      _
    %1381 = vsyncpa [#allocation4], 1
    %s1382 = scalar_lea.sflag [#allocation4], 1
    %1383 = vsyncpa %s1382, 1
    %1384 = vsyncpa [#allocation7], 1
    %1385 = vsyncpa [#allocation10], 1
    %1386 = vsyncpa [#allocation5], 1
    %s1387 = scalar_lea.sflag [#allocation5], 1
    %1388 = vsyncpa %s1387, 1

</llo_original>
